<compile_context>
chip_gen: v6e
topology: v6e:2x2x1
jax: 0.10.0
libtpu: 0.0.40
codegen_flags: <defaults>
</compile_context>

<pallas_src>
import jax
import jax.numpy as jnp
from jax.experimental import pallas as pl
from jax.experimental.pallas import tpu as pltpu

_VMEM_LIMIT = 64 * 1024 * 1024  # portable cap across v5e / v6e / v7x


# ----------------------------------------------------------------------------
# In-kernel helpers
# ----------------------------------------------------------------------------
def _shift_w(x, dw):
    # y[:, w, :] = x[:, w + dw, :]  (zero-filled out of range), dw in {-1,0,1}
    h, wd, c = x.shape
    if dw == 0:
        return x
    zero_col = jnp.zeros((h, 1, c), x.dtype)
    if dw < 0:
        return jnp.concatenate([zero_col, x[:, :wd - 1, :]], axis=1)
    return jnp.concatenate([x[:, 1:, :], zero_col], axis=1)


def _shift_h(x, dh):
    # y[h, :, :] = x[h + dh, :, :]  (zero-filled out of range), dh in {-1,0,1}
    hh, wd, c = x.shape
    if dh == 0:
        return x
    zero_row = jnp.zeros((1, wd, c), x.dtype)
    if dh < 0:
        return jnp.concatenate([zero_row, x[:hh - 1, :, :]], axis=0)
    return jnp.concatenate([x[1:, :, :], zero_row], axis=0)


def _conv3x3_body(x, w3_ref, b_ref):
    """3x3 conv, stride 1, zero pad 1, computed in VMEM without padding.

    x: (H, W, C) float32.
    w3_ref: (3, C, 3*Cout) with w3[di, ci, dj*Cout + co] = W_hwio[di, dj, ci, co].
    b_ref: (1, Cout).  Returns (H, W, Cout) float32.
    """
    hh, wd, c = x.shape
    cout = w3_ref.shape[-1] // 3
    flat = x.reshape(hh * wd, c)
    acc = jnp.zeros((hh, wd, cout), jnp.float32)
    for di in range(3):
        # One wide matmul per row shift: all three dj taps at once
        # (K = C, N = 3*Cout keeps the MXU busy; output stays lane-dense).
        z = jnp.dot(flat, w3_ref[di], preferred_element_type=jnp.float32)
        z = z.reshape(hh, wd, 3 * cout)
        zc = jnp.zeros((hh, wd, cout), jnp.float32)
        for dj in range(3):
            tap = z[:, :, dj * cout:(dj + 1) * cout]  # aligned lane slice
            zc = zc + _shift_w(tap, dj - 1)
        acc = acc + _shift_h(zc, di - 1)
    return acc + b_ref[...].astype(jnp.float32).reshape(1, 1, cout)


# ----------------------------------------------------------------------------
# Fused per-level kernels
# ----------------------------------------------------------------------------
def _top_level_kernel(x_ref, w1_ref, b1_ref, w3_ref, b3_ref, inner_ref, o_ref):
    # x_ref    : (1, H*W, Cin)   flattened backbone feature (C5)
    # w1_ref   : (Cin, C)        lateral 1x1 weights    b1_ref: (1, C)
    # w3_ref   : (3, C, 3*Cout)  3x3 slab               b3_ref: (1, Cout)
    # inner_ref: (1, H, W, C)    last_inner (consumed by next level)
    # o_ref    : (1, H, W, Cout) P5 output
    _, hh, wd, c = inner_ref.shape
    lat = jnp.dot(x_ref[0].astype(jnp.float32), w1_ref[...],
                  preferred_element_type=jnp.float32)
    lat = (lat + b1_ref[...].astype(jnp.float32)).reshape(hh, wd, c)
    inner_ref[0] = lat.astype(inner_ref.dtype)
    o_ref[0] = _conv3x3_body(lat, w3_ref, b3_ref).astype(o_ref.dtype)


def _level_kernel(td_ref, x_ref, w1_ref, b1_ref, w3_ref, b3_ref,
                  inner_ref, o_ref):
    # td_ref   : (1, h, w, C)       previous last_inner (gets 2x upsampled)
    # x_ref    : (1, 2h*2w, Cin)    flattened backbone feature at this level
    # inner_ref: (1, 2h, 2w, C)     new last_inner
    # o_ref    : (1, 2h, 2w, Cout)  P-level output (3x3 conv of inner)
    _, hh, wd, c = inner_ref.shape
    lat = jnp.dot(x_ref[0].astype(jnp.float32), w1_ref[...],
                  preferred_element_type=jnp.float32)
    lat = (lat + b1_ref[...].astype(jnp.float32)).reshape(hh, wd, c)
    td = td_ref[0].astype(jnp.float32)
    up = jnp.repeat(jnp.repeat(td, 2, axis=0), 2, axis=1)   # 2x nearest
    inner = lat + up
    inner_ref[0] = inner.astype(inner_ref.dtype)
    o_ref[0] = _conv3x3_body(inner, w3_ref, b3_ref).astype(o_ref.dtype)


# ----------------------------------------------------------------------------
# Wrappers (glue: reshapes / pallas_call plumbing)
# ----------------------------------------------------------------------------
def _w3_to_slab(w_hwio):
    # (3, 3, C, Cout) HWIO -> (3, C, 3*Cout) with slab[di, ci, dj*Cout + co]
    kh, kw, c, cout = w_hwio.shape
    return jnp.transpose(w_hwio, (0, 2, 1, 3)).reshape(kh, c, kw * cout)


def fpn_top_level(x, w1, b1, w3_hwio, b3):
    """Fused lateral 1x1 + 3x3 conv for the smallest-resolution level.
    x: (N, H, W, Cin) NHWC.  Returns (last_inner, p_level_output)."""
    n, h, w, cin = x.shape
    c = w1.shape[1]
    cout = w3_hwio.shape[-1]
    rows = h * w
    xf = x.reshape(n, rows, cin)
    w3 = _w3_to_slab(w3_hwio)
    return pl.pallas_call(
        _top_level_kernel,
        out_shape=(jax.ShapeDtypeStruct((n, h, w, c), x.dtype),
                   jax.ShapeDtypeStruct((n, h, w, cout), x.dtype)),
        grid=(n,),
        in_specs=[
            pl.BlockSpec((1, rows, cin), lambda i: (i, 0, 0)),
            pl.BlockSpec((cin, c), lambda i: (0, 0)),
            pl.BlockSpec((1, c), lambda i: (0, 0)),
            pl.BlockSpec((3, c, 3 * cout), lambda i: (0, 0, 0)),
            pl.BlockSpec((1, cout), lambda i: (0, 0)),
        ],
        out_specs=(pl.BlockSpec((1, h, w, c), lambda i: (i, 0, 0, 0)),
                   pl.BlockSpec((1, h, w, cout), lambda i: (i, 0, 0, 0))),
        compiler_params=pltpu.CompilerParams(
            dimension_semantics=("parallel",),
            vmem_limit_bytes=_VMEM_LIMIT),
    )(xf, w1, b1.reshape(1, c), w3, b3.reshape(1, cout))


def fpn_level(top_down, feature, w1, b1, w3_hwio, b3):
    """Fused lateral 1x1 + 2x nearest-upsample-add + 3x3 conv for one level.
    top_down: (N, h, w, C); feature: (N, 2h, 2w, Cin) NHWC.
    Returns (new_inner, p_level_output)."""
    n, h, w, c = top_down.shape
    nf, hf, wf, cin = feature.shape
    # TODO(synk): real backbones can produce odd sizes where 2*h != hf; the
    # reference F.interpolate(scale_factor=2) path then needs crop/alignment.
    assert (nf, hf, wf) == (n, 2 * h, 2 * w), "expect exact 2x pyramid levels"
    cout = w3_hwio.shape[-1]
    rows = hf * wf
    ff = feature.reshape(n, rows, cin)
    w3 = _w3_to_slab(w3_hwio)
    return pl.pallas_call(
        _level_kernel,
        out_shape=(jax.ShapeDtypeStruct((n, hf, wf, c), feature.dtype),
                   jax.ShapeDtypeStruct((n, hf, wf, cout), feature.dtype)),
        grid=(n,),
        in_specs=[
            pl.BlockSpec((1, h, w, c), lambda i: (i, 0, 0, 0)),
            pl.BlockSpec((1, rows, cin), lambda i: (i, 0, 0)),
            pl.BlockSpec((cin, c), lambda i: (0, 0)),
            pl.BlockSpec((1, c), lambda i: (0, 0)),
            pl.BlockSpec((3, c, 3 * cout), lambda i: (0, 0, 0)),
            pl.BlockSpec((1, cout), lambda i: (0, 0)),
        ],
        out_specs=(pl.BlockSpec((1, hf, wf, c), lambda i: (i, 0, 0, 0)),
                   pl.BlockSpec((1, hf, wf, cout), lambda i: (i, 0, 0, 0))),
        compiler_params=pltpu.CompilerParams(
            dimension_semantics=("parallel",),
            vmem_limit_bytes=_VMEM_LIMIT),
    )(top_down, ff, w1, b1.reshape(1, c), w3, b3.reshape(1, cout))


# ----------------------------------------------------------------------------
# FPN module (parameters + forward)
# ----------------------------------------------------------------------------
def init_fpn_params(key, in_channels_list, out_channels):
    """Kaiming-uniform (a=1) weights, zero biases — matches conv_block init."""
    params = []
    for cin in in_channels_list:
        key, k1, k2 = jax.random.split(key, 3)
        b1 = (3.0 / cin) ** 0.5                        # fan_in = cin * 1 * 1
        inner_w = jax.random.uniform(k1, (cin, out_channels), jnp.float32, -b1, b1)
        inner_b = jnp.zeros((out_channels,), jnp.float32)
        b3 = (3.0 / (out_channels * 9)) ** 0.5         # fan_in = C * 3 * 3
        layer_w = jax.random.uniform(k2, (3, 3, out_channels, out_channels),
                                     jnp.float32, -b3, b3)
        layer_b = jnp.zeros((out_channels,), jnp.float32)
        params.append(dict(inner_w=inner_w, inner_b=inner_b,
                           layer_w=layer_w, layer_b=layer_b))
    return params


def fpn_forward(params, x_nchw_list):
    """FPN forward.  Inputs: list of NCHW feature maps (increasing depth).
    Returns tuple of NCHW outputs, highest resolution first, plus P6 from
    LastLevelMaxPool."""
    feats = [jnp.transpose(x, (0, 2, 3, 1)) for x in x_nchw_list]   # -> NHWC

    p = params[-1]
    last_inner, top_out = fpn_top_level(feats[-1], p["inner_w"], p["inner_b"],
                                        p["layer_w"], p["layer_b"])
    results = [top_out]

    for feature, p in zip(feats[:-1][::-1], params[:-1][::-1]):
        last_inner, out = fpn_level(last_inner, feature,
                                    p["inner_w"], p["inner_b"],
                                    p["layer_w"], p["layer_b"])
        results.insert(0, out)

    # LastLevelMaxPool: F.max_pool2d(x, 1, 2, 0) is a pure stride-2 subsample
    # of the smallest map — negligible traffic, done as a plain XLA slice.
    results.append(results[-1][:, ::2, ::2, :])

    return tuple(jnp.transpose(r, (0, 3, 1, 2)) for r in results)   # -> NCHW


# ----------------------------------------------------------------------------
# Pure-JAX reference (for correctness check)
# ----------------------------------------------------------------------------
def _ref_conv(x, w_hwio, b, padding):
    y = jax.lax.conv_general_dilated(
        x, w_hwio, window_strides=(1, 1), padding=padding,
        dimension_numbers=("NHWC", "HWIO", "NHWC"))
    return y + b.reshape(1, 1, 1, -1)


def fpn_forward_ref(params, x_nchw_list):
    feats = [jnp.transpose(x, (0, 2, 3, 1)) for x in x_nchw_list]
    p = params[-1]
    last_inner = _ref_conv(feats[-1], p["inner_w"][None, None], p["inner_b"], "VALID")
    results = [_ref_conv(last_inner, p["layer_w"], p["layer_b"], [(1, 1), (1, 1)])]
    for feature, p in zip(feats[:-1][::-1], params[:-1][::-1]):
        up = jnp.repeat(jnp.repeat(last_inner, 2, axis=1), 2, axis=2)
        lat = _ref_conv(feature, p["inner_w"][None, None], p["inner_b"], "VALID")
        last_inner = lat + up
        results.insert(0, _ref_conv(last_inner, p["layer_w"], p["layer_b"],
                                    [(1, 1), (1, 1)]))
    results.append(results[-1][:, ::2, ::2, :])
    return tuple(jnp.transpose(r, (0, 3, 1, 2)) for r in results)


# ----------------------------------------------------------------------------
if __name__ == "__main__":
    key = jax.random.PRNGKey(0)

    N = 2
    out_channels = 128                    # lane-dense FPN channels (>= 128)
    in_channels_list = [16, 32, 64, 128]  # C2..C5 channel counts
    spatials = [32, 16, 8, 4]             # consecutive /2 resolutions

    key, pk = jax.random.split(key)
    params = init_fpn_params(pk, in_channels_list, out_channels)

    xs = []
    for cin, s in zip(in_channels_list, spatials):
        key, xk = jax.random.split(key)
        xs.append(jax.random.normal(xk, (N, cin, s, s), jnp.float32))  # NCHW

    outs = jax.block_until_ready(fpn_forward(params, xs))
    refs = fpn_forward_ref(params, xs)

    ok = True
    for o, r in zip(outs, refs):
        ok = ok and (o.shape == r.shape)
        ok = ok and bool(jnp.allclose(o, r, rtol=1e-3, atol=1e-3))

    if ok:
        print("KERNEL_OK")
    else:
        print("MISMATCH")
</pallas_src>

<mosaic_0001>
module attributes {stable_mosaic.version = 11 : i64} {
  func.func @_top_level_kernel(%arg0: i32, %arg1: memref<1x16x128xf32, #tpu.memory_space<vmem>>, %arg2: memref<128x128xf32, #tpu.memory_space<vmem>>, %arg3: memref<1x128xf32, #tpu.memory_space<vmem>>, %arg4: memref<3x128x384xf32, #tpu.memory_space<vmem>>, %arg5: memref<1x128xf32, #tpu.memory_space<vmem>>, %arg6: memref<1x4x4x128xf32, #tpu.memory_space<vmem>>, %arg7: memref<1x4x4x128xf32, #tpu.memory_space<vmem>>) attributes {dimension_semantics = [#tpu.dimension_semantics<parallel>], iteration_bounds = array<i64: 2>, scalar_prefetch = 0 : i64, scratch_operands = 0 : i64, tpu.core_type = #tpu.core_type<tc>, window_params = [{transform_indices = @transform_0, window_bounds = array<i64: 1, 16, 128>}, {pipeline_mode = #tpu.pipeline_mode<synchronous>, transform_indices = @transform_1, window_bounds = array<i64: 128, 128>}, {pipeline_mode = #tpu.pipeline_mode<synchronous>, transform_indices = @transform_2, window_bounds = array<i64: 1, 128>}, {pipeline_mode = #tpu.pipeline_mode<synchronous>, transform_indices = @transform_3, window_bounds = array<i64: 3, 128, 384>}, {pipeline_mode = #tpu.pipeline_mode<synchronous>, transform_indices = @transform_4, window_bounds = array<i64: 1, 128>}, {transform_indices = @transform_5, window_bounds = array<i64: 1, 4, 4, 128>}, {transform_indices = @transform_6, window_bounds = array<i64: 1, 4, 4, 128>}]} {
    %c0 = arith.constant 0 : index
    %c0_0 = arith.constant 0 : index
    %c0_1 = arith.constant 0 : index
    %0 = vector.load %arg1[%c0, %c0_0, %c0_1] : memref<1x16x128xf32, #tpu.memory_space<vmem>>, vector<1x16x128xf32>
    %1 = vector.shape_cast %0 : vector<1x16x128xf32> to vector<16x128xf32>
    %c0_2 = arith.constant 0 : index
    %c0_3 = arith.constant 0 : index
    %2 = vector.load %arg2[%c0_2, %c0_3] : memref<128x128xf32, #tpu.memory_space<vmem>>, vector<128x128xf32>
    %cst = arith.constant dense<0.000000e+00> : vector<16x128xf32>
    %3 = tpu.matmul %1, %2, %cst {dimension_numbers = #tpu.dot_dimension_numbers<[1], [0], [0], [1], [0, 0, 1, 1], [], []>} : vector<16x128xf32>, vector<128x128xf32>, vector<16x128xf32> -> vector<16x128xf32>
    %c0_4 = arith.constant 0 : index
    %c0_5 = arith.constant 0 : index
    %4 = vector.load %arg3[%c0_4, %c0_5] : memref<1x128xf32, #tpu.memory_space<vmem>>, vector<1x128xf32>
    %5 = vector.broadcast %4 : vector<1x128xf32> to vector<16x128xf32>
    %6 = arith.addf %3, %5 : vector<16x128xf32>
    %7 = vector.shape_cast %6 : vector<16x128xf32> to vector<4x4x128xf32>
    %c0_6 = arith.constant 0 : index
    %c0_7 = arith.constant 0 : index
    %c0_8 = arith.constant 0 : index
    %c0_9 = arith.constant 0 : index
    %8 = vector.load %arg6[%c0_6, %c0_7, %c0_8, %c0_9] : memref<1x4x4x128xf32, #tpu.memory_space<vmem>>, vector<1x4x4x128xf32>
    %9 = vector.shape_cast %8 : vector<1x4x4x128xf32> to vector<4x4x128xf32>
    %10 = vector.shape_cast %7 : vector<4x4x128xf32> to vector<1x4x4x128xf32>
    tpu.vector_store %arg6[%c0_6, %c0_7, %c0_8, %c0_9], %10 {strides = array<i32>} : memref<1x4x4x128xf32, #tpu.memory_space<vmem>>, vector<1x4x4x128xf32>,
    %11 = vector.shape_cast %7 : vector<4x4x128xf32> to vector<16x128xf32>
    %cst_10 = arith.constant 0.000000e+00 : f32
    %12 = vector.broadcast %cst_10 : f32 to vector<4x4x128xf32>
    %c0_11 = arith.constant 0 : index
    %c0_12 = arith.constant 0 : index
    %c0_13 = arith.constant 0 : index
    %13 = vector.load %arg4[%c0_11, %c0_12, %c0_13] : memref<3x128x384xf32, #tpu.memory_space<vmem>>, vector<1x128x384xf32>
    %14 = vector.shape_cast %13 : vector<1x128x384xf32> to vector<128x384xf32>
    %cst_14 = arith.constant dense<0.000000e+00> : vector<16x384xf32>
    %15 = tpu.matmul %11, %14, %cst_14 {dimension_numbers = #tpu.dot_dimension_numbers<[1], [0], [0], [1], [0, 0, 1, 1], [], []>} : vector<16x128xf32>, vector<128x384xf32>, vector<16x384xf32> -> vector<16x384xf32>
    %16 = vector.shape_cast %15 : vector<16x384xf32> to vector<4x4x384xf32>
    %cst_15 = arith.constant 0.000000e+00 : f32
    %17 = vector.broadcast %cst_15 : f32 to vector<4x4x128xf32>
    %18 = vector.extract_strided_slice %16 {offsets = [0, 0, 0], sizes = [4, 4, 128], strides = [1, 1, 1]} : vector<4x4x384xf32> to vector<4x4x128xf32>
    %cst_16 = arith.constant 0.000000e+00 : f32
    %19 = vector.broadcast %cst_16 : f32 to vector<4x1x128xf32>
    %20 = vector.extract_strided_slice %18 {offsets = [0, 0, 0], sizes = [4, 3, 128], strides = [1, 1, 1]} : vector<4x4x128xf32> to vector<4x3x128xf32>
    %21 = tpu.concatenate %19, %20 in 1 : vector<4x1x128xf32>, vector<4x3x128xf32> -> vector<4x4x128xf32>
    %22 = arith.addf %17, %21 : vector<4x4x128xf32>
    %23 = vector.extract_strided_slice %16 {offsets = [0, 0, 128], sizes = [4, 4, 128], strides = [1, 1, 1]} : vector<4x4x384xf32> to vector<4x4x128xf32>
    %24 = arith.addf %22, %23 : vector<4x4x128xf32>
    %25 = vector.extract_strided_slice %16 {offsets = [0, 0, 256], sizes = [4, 4, 128], strides = [1, 1, 1]} : vector<4x4x384xf32> to vector<4x4x128xf32>
    %cst_17 = arith.constant 0.000000e+00 : f32
    %26 = vector.broadcast %cst_17 : f32 to vector<4x1x128xf32>
    %27 = vector.extract_strided_slice %25 {offsets = [0, 1, 0], sizes = [4, 3, 128], strides = [1, 1, 1]} : vector<4x4x128xf32> to vector<4x3x128xf32>
    %28 = tpu.concatenate %27, %26 in 1 : vector<4x3x128xf32>, vector<4x1x128xf32> -> vector<4x4x128xf32>
    %29 = arith.addf %24, %28 : vector<4x4x128xf32>
    %cst_18 = arith.constant 0.000000e+00 : f32
    %30 = vector.broadcast %cst_18 : f32 to vector<1x4x128xf32>
    %31 = vector.extract_strided_slice %29 {offsets = [0, 0, 0], sizes = [3, 4, 128], strides = [1, 1, 1]} : vector<4x4x128xf32> to vector<3x4x128xf32>
    %32 = tpu.concatenate %30, %31 in 0 : vector<1x4x128xf32>, vector<3x4x128xf32> -> vector<4x4x128xf32>
    %33 = arith.addf %12, %32 : vector<4x4x128xf32>
    %c1 = arith.constant 1 : index
    %c0_19 = arith.constant 0 : index
    %c0_20 = arith.constant 0 : index
    %34 = vector.load %arg4[%c1, %c0_19, %c0_20] : memref<3x128x384xf32, #tpu.memory_space<vmem>>, vector<1x128x384xf32>
    %35 = vector.shape_cast %34 : vector<1x128x384xf32> to vector<128x384xf32>
    %cst_21 = arith.constant dense<0.000000e+00> : vector<16x384xf32>
    %36 = tpu.matmul %11, %35, %cst_21 {dimension_numbers = #tpu.dot_dimension_numbers<[1], [0], [0], [1], [0, 0, 1, 1], [], []>} : vector<16x128xf32>, vector<128x384xf32>, vector<16x384xf32> -> vector<16x384xf32>
    %37 = vector.shape_cast %36 : vector<16x384xf32> to vector<4x4x384xf32>
    %cst_22 = arith.constant 0.000000e+00 : f32
    %38 = vector.broadcast %cst_22 : f32 to vector<4x4x128xf32>
    %39 = vector.extract_strided_slice %37 {offsets = [0, 0, 0], sizes = [4, 4, 128], strides = [1, 1, 1]} : vector<4x4x384xf32> to vector<4x4x128xf32>
    %cst_23 = arith.constant 0.000000e+00 : f32
    %40 = vector.broadcast %cst_23 : f32 to vector<4x1x128xf32>
    %41 = vector.extract_strided_slice %39 {offsets = [0, 0, 0], sizes = [4, 3, 128], strides = [1, 1, 1]} : vector<4x4x128xf32> to vector<4x3x128xf32>
    %42 = tpu.concatenate %40, %41 in 1 : vector<4x1x128xf32>, vector<4x3x128xf32> -> vector<4x4x128xf32>
    %43 = arith.addf %38, %42 : vector<4x4x128xf32>
    %44 = vector.extract_strided_slice %37 {offsets = [0, 0, 128], sizes = [4, 4, 128], strides = [1, 1, 1]} : vector<4x4x384xf32> to vector<4x4x128xf32>
    %45 = arith.addf %43, %44 : vector<4x4x128xf32>
    %46 = vector.extract_strided_slice %37 {offsets = [0, 0, 256], sizes = [4, 4, 128], strides = [1, 1, 1]} : vector<4x4x384xf32> to vector<4x4x128xf32>
    %cst_24 = arith.constant 0.000000e+00 : f32
    %47 = vector.broadcast %cst_24 : f32 to vector<4x1x128xf32>
    %48 = vector.extract_strided_slice %46 {offsets = [0, 1, 0], sizes = [4, 3, 128], strides = [1, 1, 1]} : vector<4x4x128xf32> to vector<4x3x128xf32>
    %49 = tpu.concatenate %48, %47 in 1 : vector<4x3x128xf32>, vector<4x1x128xf32> -> vector<4x4x128xf32>
    %50 = arith.addf %45, %49 : vector<4x4x128xf32>
    %51 = arith.addf %33, %50 : vector<4x4x128xf32>
    %c2 = arith.constant 2 : index
    %c0_25 = arith.constant 0 : index
    %c0_26 = arith.constant 0 : index
    %52 = vector.load %arg4[%c2, %c0_25, %c0_26] : memref<3x128x384xf32, #tpu.memory_space<vmem>>, vector<1x128x384xf32>
    %53 = vector.shape_cast %52 : vector<1x128x384xf32> to vector<128x384xf32>
    %cst_27 = arith.constant dense<0.000000e+00> : vector<16x384xf32>
    %54 = tpu.matmul %11, %53, %cst_27 {dimension_numbers = #tpu.dot_dimension_numbers<[1], [0], [0], [1], [0, 0, 1, 1], [], []>} : vector<16x128xf32>, vector<128x384xf32>, vector<16x384xf32> -> vector<16x384xf32>
    %55 = vector.shape_cast %54 : vector<16x384xf32> to vector<4x4x384xf32>
    %cst_28 = arith.constant 0.000000e+00 : f32
    %56 = vector.broadcast %cst_28 : f32 to vector<4x4x128xf32>
    %57 = vector.extract_strided_slice %55 {offsets = [0, 0, 0], sizes = [4, 4, 128], strides = [1, 1, 1]} : vector<4x4x384xf32> to vector<4x4x128xf32>
    %cst_29 = arith.constant 0.000000e+00 : f32
    %58 = vector.broadcast %cst_29 : f32 to vector<4x1x128xf32>
    %59 = vector.extract_strided_slice %57 {offsets = [0, 0, 0], sizes = [4, 3, 128], strides = [1, 1, 1]} : vector<4x4x128xf32> to vector<4x3x128xf32>
    %60 = tpu.concatenate %58, %59 in 1 : vector<4x1x128xf32>, vector<4x3x128xf32> -> vector<4x4x128xf32>
    %61 = arith.addf %56, %60 : vector<4x4x128xf32>
    %62 = vector.extract_strided_slice %55 {offsets = [0, 0, 128], sizes = [4, 4, 128], strides = [1, 1, 1]} : vector<4x4x384xf32> to vector<4x4x128xf32>
    %63 = arith.addf %61, %62 : vector<4x4x128xf32>
    %64 = vector.extract_strided_slice %55 {offsets = [0, 0, 256], sizes = [4, 4, 128], strides = [1, 1, 1]} : vector<4x4x384xf32> to vector<4x4x128xf32>
    %cst_30 = arith.constant 0.000000e+00 : f32
    %65 = vector.broadcast %cst_30 : f32 to vector<4x1x128xf32>
    %66 = vector.extract_strided_slice %64 {offsets = [0, 1, 0], sizes = [4, 3, 128], strides = [1, 1, 1]} : vector<4x4x128xf32> to vector<4x3x128xf32>
    %67 = tpu.concatenate %66, %65 in 1 : vector<4x3x128xf32>, vector<4x1x128xf32> -> vector<4x4x128xf32>
    %68 = arith.addf %63, %67 : vector<4x4x128xf32>
    %cst_31 = arith.constant 0.000000e+00 : f32
    %69 = vector.broadcast %cst_31 : f32 to vector<1x4x128xf32>
    %70 = vector.extract_strided_slice %68 {offsets = [1, 0, 0], sizes = [3, 4, 128], strides = [1, 1, 1]} : vector<4x4x128xf32> to vector<3x4x128xf32>
    %71 = tpu.concatenate %70, %69 in 0 : vector<3x4x128xf32>, vector<1x4x128xf32> -> vector<4x4x128xf32>
    %72 = arith.addf %51, %71 : vector<4x4x128xf32>
    %c0_32 = arith.constant 0 : index
    %c0_33 = arith.constant 0 : index
    %73 = vector.load %arg5[%c0_32, %c0_33] : memref<1x128xf32, #tpu.memory_space<vmem>>, vector<1x128xf32>
    %74 = vector.shape_cast %73 : vector<1x128xf32> to vector<1x1x128xf32>
    %75 = vector.broadcast %74 : vector<1x1x128xf32> to vector<4x4x128xf32>
    %76 = arith.addf %72, %75 : vector<4x4x128xf32>
    %c0_34 = arith.constant 0 : index
    %c0_35 = arith.constant 0 : index
    %c0_36 = arith.constant 0 : index
    %c0_37 = arith.constant 0 : index
    %77 = vector.load %arg7[%c0_34, %c0_35, %c0_36, %c0_37] : memref<1x4x4x128xf32, #tpu.memory_space<vmem>>, vector<1x4x4x128xf32>
    %78 = vector.shape_cast %77 : vector<1x4x4x128xf32> to vector<4x4x128xf32>
    %79 = vector.shape_cast %76 : vector<4x4x128xf32> to vector<1x4x4x128xf32>
    tpu.vector_store %arg7[%c0_34, %c0_35, %c0_36, %c0_37], %79 {strides = array<i32>} : memref<1x4x4x128xf32, #tpu.memory_space<vmem>>, vector<1x4x4x128xf32>,
    return
  }
  func.func @transform_0(%arg0: i32) -> (i32, i32, i32) {
    %c0_i32 = arith.constant 0 : i32
    %c0_i32_0 = arith.constant 0 : i32
    %c0_i32_1 = arith.constant 0 : i32
    return %arg0, %c0_i32, %c0_i32_0 : i32, i32, i32
  }
  func.func @transform_1(%arg0: i32) -> (i32, i32) {
    %c0_i32 = arith.constant 0 : i32
    %c0_i32_0 = arith.constant 0 : i32
    %c0_i32_1 = arith.constant 0 : i32
    return %c0_i32, %c0_i32_0 : i32, i32
  }
  func.func @transform_2(%arg0: i32) -> (i32, i32) {
    %c0_i32 = arith.constant 0 : i32
    %c0_i32_0 = arith.constant 0 : i32
    %c0_i32_1 = arith.constant 0 : i32
    return %c0_i32, %c0_i32_0 : i32, i32
  }
  func.func @transform_3(%arg0: i32) -> (i32, i32, i32) {
    %c0_i32 = arith.constant 0 : i32
    %c0_i32_0 = arith.constant 0 : i32
    %c0_i32_1 = arith.constant 0 : i32
    %c0_i32_2 = arith.constant 0 : i32
    return %c0_i32, %c0_i32_0, %c0_i32_1 : i32, i32, i32
  }
  func.func @transform_4(%arg0: i32) -> (i32, i32) {
    %c0_i32 = arith.constant 0 : i32
    %c0_i32_0 = arith.constant 0 : i32
    %c0_i32_1 = arith.constant 0 : i32
    return %c0_i32, %c0_i32_0 : i32, i32
  }
  func.func @transform_5(%arg0: i32) -> (i32, i32, i32, i32) {
    %c0_i32 = arith.constant 0 : i32
    %c0_i32_0 = arith.constant 0 : i32
    %c0_i32_1 = arith.constant 0 : i32
    %c0_i32_2 = arith.constant 0 : i32
    return %arg0, %c0_i32, %c0_i32_0, %c0_i32_1 : i32, i32, i32, i32
  }
  func.func @transform_6(%arg0: i32) -> (i32, i32, i32, i32) {
    %c0_i32 = arith.constant 0 : i32
    %c0_i32_0 = arith.constant 0 : i32
    %c0_i32_1 = arith.constant 0 : i32
    %c0_i32_2 = arith.constant 0 : i32
    return %arg0, %c0_i32, %c0_i32_0, %c0_i32_1 : i32, i32, i32, i32
  }
}

</mosaic_0001>

<llo_original>
// kernel: tpu_custom_call.1
$region0: #{tpu_custom_call.1}
  #allocation0 [shape = 'u32[]', space=smem, size = 0x4, offset = 0x4, fixed_abs, tag = 'smem constant byte address 0x4 - core index']
  #allocation1 [shape = 'u32[144,128]{1,0:T(1,128)}', space=vmem, size = 0x12000, scoped, tag = 'internal scratch']
  %s0 = inlined_call_operand.hbm [shape: f32[2,16,128], index: 0, kind: input, shape index: {}]
  %s1 = inlined_call_operand.hbm [shape: f32[128,128], index: 1, kind: input, shape index: {}]
  %s2 = inlined_call_operand.vmem [shape: f32[1,128], index: 2, kind: input, shape index: {}]
  %s3 = inlined_call_operand.hbm [shape: f32[3,128,384], index: 3, kind: input, shape index: {}]
  %s4 = inlined_call_operand.vmem [shape: f32[1,128], index: 4, kind: input, shape index: {}]
  %s5 = inlined_call_operand.hbm [shape: f32[2,4,4,128], index: 5, kind: output, shape index: {0}]
  %s6 = inlined_call_operand.hbm [shape: f32[2,4,4,128], index: 6, kind: output, shape index: {1}]
  %7 = xla_tuple %s5, %s6
  %s8 = sld [smem:[#allocation0]]
  $region73: #{tpu_custom_call.1} parent=0
    _
  %s10 = ssub.s32 1, %s8
  %s11 = scalar_select 0, %s10, %s8
  $region1: #{tpu_custom_call.1} parent=0
    #allocation2 [shape = 'u8[16384]{0}', space=vmem, size = 0x4000, scoped, tag = 'input window, operand 0']
    #allocation3 [shape = 's32[2]{0}', space=sflag, size = 0x8, scoped, tag = 'scoped memory for tpu_custom_call.1']
    #allocation4 [shape = 's32[2]{0}', space=sflag, size = 0x8, scoped, tag = 'scoped memory for tpu_custom_call.1']
    #allocation5 [shape = 'u8[65536]{0}', space=vmem, size = 0x10000, scoped, tag = 'input window, operand 1, single buffered']
    #allocation6 [shape = 's32[1]{0}', space=sflag, size = 0x4, scoped, tag = 'scoped memory for tpu_custom_call.1']
    #allocation7 [shape = 'u8[589824]{0}', space=vmem, size = 0x90000, scoped, tag = 'input window, operand 3, single buffered']
    #allocation8 [shape = 'u8[16384]{0}', space=vmem, size = 0x4000, scoped, tag = 'output window, operand 0']
    #allocation9 [shape = 'u8[16384]{0}', space=vmem, size = 0x4000, scoped, tag = 'output window, operand 1']
    #allocation10 [shape = 's32[2]{0}', space=sflag, size = 0x8, scoped, tag = 'scoped memory for tpu_custom_call.1']
    %12 = vsyncpa [#allocation3], 0
    %s13 = scalar_lea.sflag [#allocation3], 1
    %14 = vsyncpa %s13, 0
    %15 = vsyncpa [#allocation6], 0
    %16 = vsyncpa [#allocation4], 0
    %s17 = scalar_lea.sflag [#allocation4], 1
    %18 = vsyncpa %s17, 0
    %19 = vsyncpa [#allocation10], 0
    %s20 = scalar_lea.sflag [#allocation10], 1
    %21 = vsyncpa %s20, 0
    loop: start=0, step=1, limit=4
    $region2: #{tpu_custom_call.1} parent=1 // loop_pre_header
      _
    $region3: #{tpu_custom_call.1} parent=1 // loop_header
      %s23 = sphi 0, %s27
      %p24 = scmp.ge.s32.totalorder %s23, 4
      %s33 = sphi 0, %s35
      %s36 = sphi 0, %s33
      %s37 = sphi 0, %s36
      %s53 = sphi 0, %s37
      %s57 = sphi 0, %s57
      %s59 = sphi 0, %s57
      %s60 = sphi 0, %s59
      %s74 = sphi 0, %s60
      %s78 = sphi 0, %s78
      %s80 = sphi 0, %s78
      %s81 = sphi 0, %s80
      %s95 = sphi 0, %s81
      %s99 = sphi 0, %s99
      %s101 = sphi 0, %s99
      %s102 = sphi 0, %s101
      %s116 = sphi 0, %s102
      %s120 = sphi 0, %s120
      %s122 = sphi 0, %s120
      %s123 = sphi 0, %s122
      %s137 = sphi 0, %s123
      %s143 = sphi 0, %s145
      %s146 = sphi 0, %s143
      %s147 = sphi 0, %s146
      %s163 = sphi 0, %s147
      %s169 = sphi 0, %s171
      %s172 = sphi 0, %s169
      %s173 = sphi 0, %s172
      %s189 = sphi 0, %s173
    $region4: #{tpu_custom_call.1} parent=1 // loop_header_branch
      %26 = sbr.rel (%p24) target = $region8
    $region5: #{tpu_custom_call.1} parent=1 // loop_body
      %s28 = ssub.s32 %s23, 1
      %s29 = ssub.s32 %s23, 2
      %s30 = sadd.s32 %s23, 1
      %s31 = ssub.s32 %s23, %s30
      %p32 = scmp.eq.s32.totalorder %s31, 0
      %s34 = sadd.s32 %s33, 1
      %s35 = scalar_select %p32, %s33, %s34
      %p38 = pneg %p32
      %p39 = scmp.eq.s32.totalorder %s23, 1
      %p40 = por %p38, %p39
      %p41 = scmp.ne.s32.totalorder %s33, %s36
      %p42 = scmp.eq.s32.totalorder %s23, 0
      %p43 = por %p41, %p42
      %p44 = scmp.ne.s32.totalorder %s33, %s36
      %p45 = scmp.eq.s32.totalorder %s28, 1
      %p46 = por %p44, %p45
      %p47 = scmp.ne.s32.totalorder %s36, %s37
      %p48 = scmp.eq.s32.totalorder %s28, 0
      %p49 = por %p47, %p48
      %p50 = scmp.ne.s32.totalorder %s36, %s37
      %p51 = scmp.eq.s32.totalorder %s29, 1
      %p52 = por %p50, %p51
      %p54 = scmp.ne.s32.totalorder %s37, %s53
      %p55 = scmp.eq.s32.totalorder %s29, 0
      %p56 = por %p54, %p55
      %s58 = sadd.s32 %s57, 1
      %p61 = scmp.eq.s32.totalorder %s23, 1
      %p62 = scmp.ne.s32.totalorder %s57, %s59
      %p63 = scmp.eq.s32.totalorder %s23, 0
      %p64 = por %p62, %p63
      %p65 = scmp.ne.s32.totalorder %s57, %s59
      %p66 = scmp.eq.s32.totalorder %s28, 1
      %p67 = por %p65, %p66
      %p68 = scmp.ne.s32.totalorder %s59, %s60
      %p69 = scmp.eq.s32.totalorder %s28, 0
      %p70 = por %p68, %p69
      %p71 = scmp.ne.s32.totalorder %s59, %s60
      %p72 = scmp.eq.s32.totalorder %s29, 1
      %p73 = por %p71, %p72
      %p75 = scmp.ne.s32.totalorder %s60, %s74
      %p76 = scmp.eq.s32.totalorder %s29, 0
      %p77 = por %p75, %p76
      %s79 = sadd.s32 %s78, 1
      %p82 = scmp.eq.s32.totalorder %s23, 1
      %p83 = scmp.ne.s32.totalorder %s78, %s80
      %p84 = scmp.eq.s32.totalorder %s23, 0
      %p85 = por %p83, %p84
      %p86 = scmp.ne.s32.totalorder %s78, %s80
      %p87 = scmp.eq.s32.totalorder %s28, 1
      %p88 = por %p86, %p87
      %p89 = scmp.ne.s32.totalorder %s80, %s81
      %p90 = scmp.eq.s32.totalorder %s28, 0
      %p91 = por %p89, %p90
      %p92 = scmp.ne.s32.totalorder %s80, %s81
      %p93 = scmp.eq.s32.totalorder %s29, 1
      %p94 = por %p92, %p93
      %p96 = scmp.ne.s32.totalorder %s81, %s95
      %p97 = scmp.eq.s32.totalorder %s29, 0
      %p98 = por %p96, %p97
      %s100 = sadd.s32 %s99, 1
      %p103 = scmp.eq.s32.totalorder %s23, 1
      %p104 = scmp.ne.s32.totalorder %s99, %s101
      %p105 = scmp.eq.s32.totalorder %s23, 0
      %p106 = por %p104, %p105
      %p107 = scmp.ne.s32.totalorder %s99, %s101
      %p108 = scmp.eq.s32.totalorder %s28, 1
      %p109 = por %p107, %p108
      %p110 = scmp.ne.s32.totalorder %s101, %s102
      %p111 = scmp.eq.s32.totalorder %s28, 0
      %p112 = por %p110, %p111
      %p113 = scmp.ne.s32.totalorder %s101, %s102
      %p114 = scmp.eq.s32.totalorder %s29, 1
      %p115 = por %p113, %p114
      %p117 = scmp.ne.s32.totalorder %s102, %s116
      %p118 = scmp.eq.s32.totalorder %s29, 0
      %p119 = por %p117, %p118
      %s121 = sadd.s32 %s120, 1
      %p124 = scmp.eq.s32.totalorder %s23, 1
      %p125 = scmp.ne.s32.totalorder %s120, %s122
      %p126 = scmp.eq.s32.totalorder %s23, 0
      %p127 = por %p125, %p126
      %p128 = scmp.ne.s32.totalorder %s120, %s122
      %p129 = scmp.eq.s32.totalorder %s28, 1
      %p130 = por %p128, %p129
      %p131 = scmp.ne.s32.totalorder %s122, %s123
      %p132 = scmp.eq.s32.totalorder %s28, 0
      %p133 = por %p131, %p132
      %p134 = scmp.ne.s32.totalorder %s122, %s123
      %p135 = scmp.eq.s32.totalorder %s29, 1
      %p136 = por %p134, %p135
      %p138 = scmp.ne.s32.totalorder %s123, %s137
      %p139 = scmp.eq.s32.totalorder %s29, 0
      %p140 = por %p138, %p139
      %s141 = ssub.s32 %s23, %s30
      %p142 = scmp.eq.s32.totalorder %s141, 0
      %s144 = sadd.s32 %s143, 1
      %s145 = scalar_select %p142, %s143, %s144
      %p148 = pneg %p142
      %p149 = scmp.eq.s32.totalorder %s23, 1
      %p150 = por %p148, %p149
      %p151 = scmp.ne.s32.totalorder %s143, %s146
      %p152 = scmp.eq.s32.totalorder %s23, 0
      %p153 = por %p151, %p152
      %p154 = scmp.ne.s32.totalorder %s143, %s146
      %p155 = scmp.eq.s32.totalorder %s28, 1
      %p156 = por %p154, %p155
      %p157 = scmp.ne.s32.totalorder %s146, %s147
      %p158 = scmp.eq.s32.totalorder %s28, 0
      %p159 = por %p157, %p158
      %p160 = scmp.ne.s32.totalorder %s146, %s147
      %p161 = scmp.eq.s32.totalorder %s29, 1
      %p162 = por %p160, %p161
      %p164 = scmp.ne.s32.totalorder %s147, %s163
      %p165 = scmp.eq.s32.totalorder %s29, 0
      %p166 = por %p164, %p165
      %s167 = ssub.s32 %s23, %s30
      %p168 = scmp.eq.s32.totalorder %s167, 0
      %s170 = sadd.s32 %s169, 1
      %s171 = scalar_select %p168, %s169, %s170
      %p174 = pneg %p168
      %p175 = scmp.eq.s32.totalorder %s23, 1
      %p176 = por %p174, %p175
      %p177 = scmp.ne.s32.totalorder %s169, %s172
      %p178 = scmp.eq.s32.totalorder %s23, 0
      %p179 = por %p177, %p178
      %p180 = scmp.ne.s32.totalorder %s169, %s172
      %p181 = scmp.eq.s32.totalorder %s28, 1
      %p182 = por %p180, %p181
      %p183 = scmp.ne.s32.totalorder %s172, %s173
      %p184 = scmp.eq.s32.totalorder %s28, 0
      %p185 = por %p183, %p184
      %p186 = scmp.ne.s32.totalorder %s172, %s173
      %p187 = scmp.eq.s32.totalorder %s29, 1
      %p188 = por %p186, %p187
      %p190 = scmp.ne.s32.totalorder %s173, %s189
      %p191 = scmp.eq.s32.totalorder %s29, 0
      %p192 = por %p190, %p191
      %p193 = scmp.le.s32.totalorder 1, %s23
      %p194 = scmp.lt.s32.totalorder %s23, 3
      %p195 = pnand %p193, %p194
      %p196 = pneg %p195
      // Predicated region
      $region9: #{tpu_custom_call.1} parent=5 // pred_check
        _
      $region10: #{tpu_custom_call.1} parent=5 // pred_check_branch
        %198 = sbr.rel (%p195) target = $region12
      $region11: #{tpu_custom_call.1} parent=5 // pred_region
        %s199 = ssub.s32 %s23, 1
        // Predicated region
        $region13: #{tpu_custom_call.1} parent=11 // pred_check
          %p200 = pneg %p70
        $region14: #{tpu_custom_call.1} parent=11 // pred_check_branch
          %202 = sbr.rel (%p200) target = $region16
        $region15: #{tpu_custom_call.1} parent=11 // pred_region
          %s204 = ssub.s32 2048, 2048
          %205 = vsyncadd [#allocation6], %s204
          %s206 = sshll.u32 [#allocation5], 4
          %s207 = int_to_ptr.vmem [resolvable:$true] %s206
          %212 = dma.hbm_to_vmem [thread:$0]  %s1, 2048, %s207, [#allocation6], 128, 128, 8
        $region16: #{tpu_custom_call.1} parent=11 // pred_fallthru
          _
        // Predicated region
        $region17: #{tpu_custom_call.1} parent=11 // pred_check
          %p213 = pneg %p91
        $region18: #{tpu_custom_call.1} parent=11 // pred_check_branch
          %215 = sbr.rel (%p213) target = $region20
        $region19: #{tpu_custom_call.1} parent=11 // pred_region
          _
        $region20: #{tpu_custom_call.1} parent=11 // pred_fallthru
          _
        // Predicated region
        $region21: #{tpu_custom_call.1} parent=11 // pred_check
          %p216 = pneg %p112
        $region22: #{tpu_custom_call.1} parent=11 // pred_check_branch
          %218 = sbr.rel (%p216) target = $region24
        $region23: #{tpu_custom_call.1} parent=11 // pred_region
          %s220 = ssub.s32 18432, 18432
          %221 = vsyncadd [#allocation6], %s220
          %s222 = sshll.u32 [#allocation7], 4
          %s223 = int_to_ptr.vmem [resolvable:$true] %s222
          %228 = dma.hbm_to_vmem [thread:$0]  %s3, 18432, %s223, [#allocation6], 384, 384, 24
        $region24: #{tpu_custom_call.1} parent=11 // pred_fallthru
          _
        // Predicated region
        $region25: #{tpu_custom_call.1} parent=11 // pred_check
          %p229 = pneg %p133
        $region26: #{tpu_custom_call.1} parent=11 // pred_check_branch
          %231 = sbr.rel (%p229) target = $region28
        $region27: #{tpu_custom_call.1} parent=11 // pred_region
          _
        $region28: #{tpu_custom_call.1} parent=11 // pred_fallthru
          _
      $region12: #{tpu_custom_call.1} parent=5 // pred_fallthru
        _
      %p232 = scmp.lt.s32.totalorder %s23, 2
      // Predicated region
      $region29: #{tpu_custom_call.1} parent=5 // pred_check
        %p233 = pneg %p232
      $region30: #{tpu_custom_call.1} parent=5 // pred_check_branch
        %235 = sbr.rel (%p233) target = $region32
      $region31: #{tpu_custom_call.1} parent=5 // pred_region
        // Predicated region
        $region33: #{tpu_custom_call.1} parent=31 // pred_check
          %p236 = pneg %p43
        $region34: #{tpu_custom_call.1} parent=31 // pred_check_branch
          %238 = sbr.rel (%p236) target = $region36
        $region35: #{tpu_custom_call.1} parent=31 // pred_region
          %s239 = sand.u32 %s33, 1
          %s240 = scalar_lea.sflag [#allocation3], %s239
          %s241 = sand.u32 %s33, 1
          %s242 = smul.addr %s241, 16
          %s243 = scalar_lea.vmem [#allocation2], %s242
          %s245 = ssub.s32 256, 256
          %246 = vsyncadd %s240, %s245
          %s247 = smul.addr %s23, 2
          %s248 = smul.addr %s247, 128
          %s249 = scalar_lea.hbm %s0, %s248
          %s250 = sshll.u32 %s243, 4
          %s251 = int_to_ptr.vmem [resolvable:$true] %s250
          %256 = dma.hbm_to_vmem [thread:$0]  %s249, 256, %s251, %s240, 128, 128, 8
        $region36: #{tpu_custom_call.1} parent=31 // pred_fallthru
          _
      $region32: #{tpu_custom_call.1} parent=5 // pred_fallthru
        _
      %p257 = scmp.le.s32.totalorder 1, %s23
      %p258 = scmp.lt.s32.totalorder %s23, 3
      %p259 = pnand %p257, %p258
      %p260 = pneg %p259
      // Predicated region
      $region37: #{tpu_custom_call.1} parent=5 // pred_check
        _
      $region38: #{tpu_custom_call.1} parent=5 // pred_check_branch
        %262 = sbr.rel (%p259) target = $region40
      $region39: #{tpu_custom_call.1} parent=5 // pred_region
        %s263 = ssub.s32 %s23, 1
        %s264 = sand.u32 %s36, 1
        %s265 = scalar_lea.sflag [#allocation3], %s264
        %s266 = sand.u32 %s36, 1
        %s267 = smul.addr %s266, 16
        %s268 = scalar_lea.vmem [#allocation2], %s267
        // Predicated region
        $region41: #{tpu_custom_call.1} parent=39 // pred_check
          %p269 = pneg %p49
        $region42: #{tpu_custom_call.1} parent=39 // pred_check_branch
          %271 = sbr.rel (%p269) target = $region44
        $region43: #{tpu_custom_call.1} parent=39 // pred_region
          %272 = dma.done %s265, 256
        $region44: #{tpu_custom_call.1} parent=39 // pred_fallthru
          _
        // Predicated region
        $region45: #{tpu_custom_call.1} parent=39 // pred_check
          %p273 = pneg %p70
        $region46: #{tpu_custom_call.1} parent=39 // pred_check_branch
          %275 = sbr.rel (%p273) target = $region48
        $region47: #{tpu_custom_call.1} parent=39 // pred_region
          %276 = dma.done [#allocation6], 2048
        $region48: #{tpu_custom_call.1} parent=39 // pred_fallthru
          _
        // Predicated region
        $region49: #{tpu_custom_call.1} parent=39 // pred_check
          %p277 = pneg %p112
        $region50: #{tpu_custom_call.1} parent=39 // pred_check_branch
          %279 = sbr.rel (%p277) target = $region52
        $region51: #{tpu_custom_call.1} parent=39 // pred_region
          %280 = dma.done [#allocation6], 18432
        $region52: #{tpu_custom_call.1} parent=39 // pred_fallthru
          _
        %s281 = sand.u32 %s36, 1
        %s282 = scalar_lea.sflag [#allocation3], %s281
        %s283 = sand.u32 %s36, 1
        %s284 = smul.addr %s283, 16
        %s285 = scalar_lea.vmem [#allocation2], %s284
        %p286 = pneg %p49
        %p287 = pneg %p46
        %p288 = pneg %p70
        %p289 = pneg %p67
        %p290 = pneg %p91
        %p291 = pneg %p88
        %p292 = pneg %p112
        %p293 = pneg %p109
        %p294 = pneg %p133
        %p295 = pneg %p130
        %p296 = pneg %p159
        %p297 = pneg %p156
        %s298 = sand.u32 %s146, 1
        %s299 = scalar_lea.sflag [#allocation4], %s298
        %s300 = sand.u32 %s146, 1
        %s301 = smul.addr %s300, 16
        %s302 = scalar_lea.vmem [#allocation8], %s301
        %p303 = pneg %p185
        %p304 = pneg %p182
        %s305 = sand.u32 %s172, 1
        %s306 = scalar_lea.sflag [#allocation10], %s305
        %s307 = sand.u32 %s172, 1
        %s308 = smul.addr %s307, 16
        %s309 = scalar_lea.vmem [#allocation9], %s308
        %v310 = vld [vmem:[%s268] sm:$0xff]
        %v311 = vld [vmem:[%s268 + $0x8] sm:$0xff]
        %v312 = vld [vmem:[#allocation5] sm:$0xff]
        %v313 = vld [vmem:[#allocation5 + $0x8] sm:$0xff]
        %v314 = vld [vmem:[#allocation5 + $0x10] sm:$0xff]
        %v315 = vld [vmem:[#allocation5 + $0x18] sm:$0xff]
        %v316 = vld [vmem:[#allocation5 + $0x20] sm:$0xff]
        %v317 = vld [vmem:[#allocation5 + $0x28] sm:$0xff]
        %v318 = vld [vmem:[#allocation5 + $0x30] sm:$0xff]
        %v319 = vld [vmem:[#allocation5 + $0x38] sm:$0xff]
        %v320 = vld [vmem:[#allocation5 + $0x40] sm:$0xff]
        %v321 = vld [vmem:[#allocation5 + $0x48] sm:$0xff]
        %v322 = vld [vmem:[#allocation5 + $0x50] sm:$0xff]
        %v323 = vld [vmem:[#allocation5 + $0x58] sm:$0xff]
        %v324 = vld [vmem:[#allocation5 + $0x60] sm:$0xff]
        %v325 = vld [vmem:[#allocation5 + $0x68] sm:$0xff]
        %v326 = vld [vmem:[#allocation5 + $0x70] sm:$0xff]
        %v327 = vld [vmem:[#allocation5 + $0x78] sm:$0xff]
        %v328 = vld [vmem:[%s2] sm:$0x1]
        %v330 = vlaneseq
        %v331 = vshrl.u32 %v330, 7
        %v332 = vsub.s32 0, %v331
        %v333 = vrot.slane %v328, %v332
        %335 = vmatprep.subr.mxu0 0.0
        %336 = vmatpush1.msra.mxu0 %v327
        %337 = vmatprep.subr.mxu0 0.0
        %338 = vmatpush1.msra.mxu0 %v326
        %339 = vmatprep.subr.mxu0 0.0
        %340 = vmatpush1.msra.mxu0 %v325
        %341 = vmatprep.subr.mxu0 0.0
        %342 = vmatpush1.msra.mxu0 %v324
        %343 = vmatprep.subr.mxu0 0.0
        %344 = vmatpush1.msra.mxu0 %v323
        %345 = vmatprep.subr.mxu0 0.0
        %346 = vmatpush1.msra.mxu0 %v322
        %347 = vmatprep.subr.mxu0 0.0
        %348 = vmatpush1.msra.mxu0 %v321
        %349 = vmatprep.subr.mxu0 0.0
        %350 = vmatpush1.msra.mxu0 %v320
        %351 = vmatprep.subr.mxu0 0.0
        %352 = vmatpush1.msra.mxu0 %v319
        %353 = vmatprep.subr.mxu0 0.0
        %354 = vmatpush1.msra.mxu0 %v318
        %355 = vmatprep.subr.mxu0 0.0
        %356 = vmatpush1.msra.mxu0 %v317
        %357 = vmatprep.subr.mxu0 0.0
        %358 = vmatpush1.msra.mxu0 %v316
        %359 = vmatprep.subr.mxu0 0.0
        %360 = vmatpush1.msra.mxu0 %v315
        %361 = vmatprep.subr.mxu0 0.0
        %362 = vmatpush1.msra.mxu0 %v314
        %363 = vmatprep.subr.mxu0 0.0
        %364 = vmatpush1.msra.mxu0 %v313
        %365 = vmatprep.subr.mxu0 0.0
        %366 = vmatpush1.msra.mxu0 %v312
        %367 = vmatprep.subr.mxu0 0.0
        %368 = vmatpush2.msra.mxu0 0.0
        %369 = vmatprep.subr.mxu0 0.0
        %370 = vmatpush2.msra.mxu0 0.0
        %371 = vmatprep.subr.mxu0 0.0
        %372 = vmatpush2.msra.mxu0 0.0
        %373 = vmatprep.subr.mxu0 0.0
        %374 = vmatpush2.msra.mxu0 0.0
        %375 = vmatprep.subr.mxu0 0.0
        %376 = vmatpush2.msra.mxu0 0.0
        %377 = vmatprep.subr.mxu0 0.0
        %378 = vmatpush2.msra.mxu0 0.0
        %379 = vmatprep.subr.mxu0 0.0
        %380 = vmatpush2.msra.mxu0 0.0
        %381 = vmatprep.subr.mxu0 0.0
        %382 = vmatpush2.msra.mxu0 0.0
        %383 = vmatprep.subr.mxu0 0.0
        %384 = vmatpush2.msra.mxu0 0.0
        %385 = vmatprep.subr.mxu0 0.0
        %386 = vmatpush2.msra.mxu0 0.0
        %387 = vmatprep.subr.mxu0 0.0
        %388 = vmatpush2.msra.mxu0 0.0
        %389 = vmatprep.subr.mxu0 0.0
        %390 = vmatpush2.msra.mxu0 0.0
        %391 = vmatprep.subr.mxu0 0.0
        %392 = vmatpush2.msra.mxu0 0.0
        %393 = vmatprep.subr.mxu0 0.0
        %394 = vmatpush2.msra.mxu0 0.0
        %395 = vmatprep.subr.mxu0 0.0
        %396 = vmatpush2.msra.mxu0 0.0
        %397 = vmatprep.subr.mxu0 0.0
        %398 = vmatpush2.msra.mxu0 0.0
        %399 = vmatprep.mubr.f32.mxu0 0.0
        %400 = vmatmul.mubr.f32.gmra.mxu0 %v310
        %v401 = vpop.f32.mrf.mxu0
        %v402 = vadd.f32 %v333, %v401
        %v403 = vpop.f32.mrf.mxu0
        %404 = vmatprep.mubr.f32.mxu0 0.0
        %405 = vmatmul.mubr.f32.gmra.mxu0 %v311
        %v406 = vpop.f32.mrf.mxu0
        %v407 = vadd.f32 %v333, %v406
        %v408 = vpop.f32.mrf.mxu0
        %409 = vdwg.mxu0
        %v412 = vcombine.high %v402, %v402
        %v413 = vcombine.high %v407, %v407
        %416 = vst [vmem:[%s302] sm:$0xf] %v402
        %417 = vst [vmem:[%s302 + $0x4] sm:$0xf] %v412
        %418 = vst [vmem:[%s302 + $0x8] sm:$0xf] %v407
        %419 = vst [vmem:[%s302 + $0xc] sm:$0xf] %v413
        %v420 = vld [vmem:[#allocation7] sm:$0xff]
        %v421 = vld [vmem:[#allocation7 + $0x8] sm:$0xff]
        %v422 = vld [vmem:[#allocation7 + $0x10] sm:$0xff]
        %v423 = vld [vmem:[#allocation7 + $0x18] sm:$0xff]
        %v424 = vld [vmem:[#allocation7 + $0x20] sm:$0xff]
        %v425 = vld [vmem:[#allocation7 + $0x28] sm:$0xff]
        %v426 = vld [vmem:[#allocation7 + $0x30] sm:$0xff]
        %v427 = vld [vmem:[#allocation7 + $0x38] sm:$0xff]
        %v428 = vld [vmem:[#allocation7 + $0x40] sm:$0xff]
        %v429 = vld [vmem:[#allocation7 + $0x48] sm:$0xff]
        %v430 = vld [vmem:[#allocation7 + $0x50] sm:$0xff]
        %v431 = vld [vmem:[#allocation7 + $0x58] sm:$0xff]
        %v432 = vld [vmem:[#allocation7 + $0x60] sm:$0xff]
        %v433 = vld [vmem:[#allocation7 + $0x68] sm:$0xff]
        %v434 = vld [vmem:[#allocation7 + $0x70] sm:$0xff]
        %v435 = vld [vmem:[#allocation7 + $0x78] sm:$0xff]
        %v436 = vld [vmem:[#allocation7 + $0x80] sm:$0xff]
        %v437 = vld [vmem:[#allocation7 + $0x88] sm:$0xff]
        %v438 = vld [vmem:[#allocation7 + $0x90] sm:$0xff]
        %v439 = vld [vmem:[#allocation7 + $0x98] sm:$0xff]
        %v440 = vld [vmem:[#allocation7 + $0xa0] sm:$0xff]
        %v441 = vld [vmem:[#allocation7 + $0xa8] sm:$0xff]
        %v442 = vld [vmem:[#allocation7 + $0xb0] sm:$0xff]
        %v443 = vld [vmem:[#allocation7 + $0xb8] sm:$0xff]
        %v444 = vld [vmem:[#allocation7 + $0xc0] sm:$0xff]
        %v445 = vld [vmem:[#allocation7 + $0xc8] sm:$0xff]
        %v446 = vld [vmem:[#allocation7 + $0xd0] sm:$0xff]
        %v447 = vld [vmem:[#allocation7 + $0xd8] sm:$0xff]
        %v448 = vld [vmem:[#allocation7 + $0xe0] sm:$0xff]
        %v449 = vld [vmem:[#allocation7 + $0xe8] sm:$0xff]
        %v450 = vld [vmem:[#allocation7 + $0xf0] sm:$0xff]
        %v451 = vld [vmem:[#allocation7 + $0xf8] sm:$0xff]
        %v452 = vld [vmem:[#allocation7 + $0x100] sm:$0xff]
        %v453 = vld [vmem:[#allocation7 + $0x108] sm:$0xff]
        %v454 = vld [vmem:[#allocation7 + $0x110] sm:$0xff]
        %v455 = vld [vmem:[#allocation7 + $0x118] sm:$0xff]
        %v456 = vld [vmem:[#allocation7 + $0x120] sm:$0xff]
        %v457 = vld [vmem:[#allocation7 + $0x128] sm:$0xff]
        %v458 = vld [vmem:[#allocation7 + $0x130] sm:$0xff]
        %v459 = vld [vmem:[#allocation7 + $0x138] sm:$0xff]
        %v460 = vld [vmem:[#allocation7 + $0x140] sm:$0xff]
        %v461 = vld [vmem:[#allocation7 + $0x148] sm:$0xff]
        %v462 = vld [vmem:[#allocation7 + $0x150] sm:$0xff]
        %v463 = vld [vmem:[#allocation7 + $0x158] sm:$0xff]
        %v464 = vld [vmem:[#allocation7 + $0x160] sm:$0xff]
        %v465 = vld [vmem:[#allocation7 + $0x168] sm:$0xff]
        %v466 = vld [vmem:[#allocation7 + $0x170] sm:$0xff]
        %v467 = vld [vmem:[#allocation7 + $0x178] sm:$0xff]
        %468 = vmatprep.subr.mxu0 %v466
        %469 = vmatpush1.msra.mxu0 %v465
        %470 = vmatprep.subr.mxu0 %v463
        %471 = vmatpush1.msra.mxu0 %v462
        %472 = vmatprep.subr.mxu0 %v460
        %473 = vmatpush1.msra.mxu0 %v459
        %474 = vmatprep.subr.mxu0 %v457
        %475 = vmatpush1.msra.mxu0 %v456
        %476 = vmatprep.subr.mxu0 %v454
        %477 = vmatpush1.msra.mxu0 %v453
        %478 = vmatprep.subr.mxu0 %v451
        %479 = vmatpush1.msra.mxu0 %v450
        %480 = vmatprep.subr.mxu0 %v448
        %481 = vmatpush1.msra.mxu0 %v447
        %482 = vmatprep.subr.mxu0 %v445
        %483 = vmatpush1.msra.mxu0 %v444
        %484 = vmatprep.subr.mxu0 %v442
        %485 = vmatpush1.msra.mxu0 %v441
        %486 = vmatprep.subr.mxu0 %v439
        %487 = vmatpush1.msra.mxu0 %v438
        %488 = vmatprep.subr.mxu0 %v436
        %489 = vmatpush1.msra.mxu0 %v435
        %490 = vmatprep.subr.mxu0 %v433
        %491 = vmatpush1.msra.mxu0 %v432
        %492 = vmatprep.subr.mxu0 %v430
        %493 = vmatpush1.msra.mxu0 %v429
        %494 = vmatprep.subr.mxu0 %v427
        %495 = vmatpush1.msra.mxu0 %v426
        %496 = vmatprep.subr.mxu0 %v424
        %497 = vmatpush1.msra.mxu0 %v423
        %498 = vmatprep.subr.mxu0 %v421
        %499 = vmatpush1.msra.mxu0 %v420
        %500 = vmatprep.subr.mxu0 0.0
        %501 = vmatpush2.msra.mxu0 0.0
        %502 = vmatprep.subr.mxu0 0.0
        %503 = vmatpush2.msra.mxu0 0.0
        %504 = vmatprep.subr.mxu0 0.0
        %505 = vmatpush2.msra.mxu0 0.0
        %506 = vmatprep.subr.mxu0 0.0
        %507 = vmatpush2.msra.mxu0 0.0
        %508 = vmatprep.subr.mxu0 0.0
        %509 = vmatpush2.msra.mxu0 0.0
        %510 = vmatprep.subr.mxu0 0.0
        %511 = vmatpush2.msra.mxu0 0.0
        %512 = vmatprep.subr.mxu0 0.0
        %513 = vmatpush2.msra.mxu0 0.0
        %514 = vmatprep.subr.mxu0 0.0
        %515 = vmatpush2.msra.mxu0 0.0
        %516 = vmatprep.subr.mxu0 0.0
        %517 = vmatpush2.msra.mxu0 0.0
        %518 = vmatprep.subr.mxu0 0.0
        %519 = vmatpush2.msra.mxu0 0.0
        %520 = vmatprep.subr.mxu0 0.0
        %521 = vmatpush2.msra.mxu0 0.0
        %522 = vmatprep.subr.mxu0 0.0
        %523 = vmatpush2.msra.mxu0 0.0
        %524 = vmatprep.subr.mxu0 0.0
        %525 = vmatpush2.msra.mxu0 0.0
        %526 = vmatprep.subr.mxu0 0.0
        %527 = vmatpush2.msra.mxu0 0.0
        %528 = vmatprep.subr.mxu0 0.0
        %529 = vmatpush2.msra.mxu0 0.0
        %530 = vmatprep.subr.mxu0 0.0
        %531 = vmatpush2.msra.mxu0 0.0
        %532 = vmatprep.mubr.f32.mxu0 0.0
        %533 = vmatmul.mubr.f32.gmra.mxu0 %v402
        %v534 = vpop.f32.mrf.mxu0
        %v535 = vadd.f32 0.0, %v534
        %v536 = vpop.f32.mrf.mxu0
        %v537 = vadd.f32 0.0, %v536
        %538 = vmatprep.mubr.f32.mxu0 0.0
        %539 = vmatmul.mubr.f32.gmra.mxu0 %v407
        %v540 = vpop.f32.mrf.mxu0
        %v541 = vadd.f32 0.0, %v540
        %v542 = vpop.f32.mrf.mxu0
        %v543 = vadd.f32 0.0, %v542
        %544 = vdwg.mxu0
        %545 = vmatprep.subr.mxu0 0.0
        %546 = vmatpush1.msra.mxu0 %v467
        %547 = vmatprep.subr.mxu0 0.0
        %548 = vmatpush1.msra.mxu0 %v464
        %549 = vmatprep.subr.mxu0 0.0
        %550 = vmatpush1.msra.mxu0 %v461
        %551 = vmatprep.subr.mxu0 0.0
        %552 = vmatpush1.msra.mxu0 %v458
        %553 = vmatprep.subr.mxu0 0.0
        %554 = vmatpush1.msra.mxu0 %v455
        %555 = vmatprep.subr.mxu0 0.0
        %556 = vmatpush1.msra.mxu0 %v452
        %557 = vmatprep.subr.mxu0 0.0
        %558 = vmatpush1.msra.mxu0 %v449
        %559 = vmatprep.subr.mxu0 0.0
        %560 = vmatpush1.msra.mxu0 %v446
        %561 = vmatprep.subr.mxu0 0.0
        %562 = vmatpush1.msra.mxu0 %v443
        %563 = vmatprep.subr.mxu0 0.0
        %564 = vmatpush1.msra.mxu0 %v440
        %565 = vmatprep.subr.mxu0 0.0
        %566 = vmatpush1.msra.mxu0 %v437
        %567 = vmatprep.subr.mxu0 0.0
        %568 = vmatpush1.msra.mxu0 %v434
        %569 = vmatprep.subr.mxu0 0.0
        %570 = vmatpush1.msra.mxu0 %v431
        %571 = vmatprep.subr.mxu0 0.0
        %572 = vmatpush1.msra.mxu0 %v428
        %573 = vmatprep.subr.mxu0 0.0
        %574 = vmatpush1.msra.mxu0 %v425
        %575 = vmatprep.subr.mxu0 0.0
        %576 = vmatpush1.msra.mxu0 %v422
        %577 = vmatprep.subr.mxu0 0.0
        %578 = vmatpush2.msra.mxu0 0.0
        %579 = vmatprep.subr.mxu0 0.0
        %580 = vmatpush2.msra.mxu0 0.0
        %581 = vmatprep.subr.mxu0 0.0
        %582 = vmatpush2.msra.mxu0 0.0
        %583 = vmatprep.subr.mxu0 0.0
        %584 = vmatpush2.msra.mxu0 0.0
        %585 = vmatprep.subr.mxu0 0.0
        %586 = vmatpush2.msra.mxu0 0.0
        %587 = vmatprep.subr.mxu0 0.0
        %588 = vmatpush2.msra.mxu0 0.0
        %589 = vmatprep.subr.mxu0 0.0
        %590 = vmatpush2.msra.mxu0 0.0
        %591 = vmatprep.subr.mxu0 0.0
        %592 = vmatpush2.msra.mxu0 0.0
        %593 = vmatprep.subr.mxu0 0.0
        %594 = vmatpush2.msra.mxu0 0.0
        %595 = vmatprep.subr.mxu0 0.0
        %596 = vmatpush2.msra.mxu0 0.0
        %597 = vmatprep.subr.mxu0 0.0
        %598 = vmatpush2.msra.mxu0 0.0
        %599 = vmatprep.subr.mxu0 0.0
        %600 = vmatpush2.msra.mxu0 0.0
        %601 = vmatprep.subr.mxu0 0.0
        %602 = vmatpush2.msra.mxu0 0.0
        %603 = vmatprep.subr.mxu0 0.0
        %604 = vmatpush2.msra.mxu0 0.0
        %605 = vmatprep.subr.mxu0 0.0
        %606 = vmatpush2.msra.mxu0 0.0
        %607 = vmatprep.subr.mxu0 0.0
        %608 = vmatpush2.msra.mxu0 0.0
        %609 = vmatprep.mubr.f32.mxu0 0.0
        %610 = vmatmul.mubr.f32.gmra.mxu0 %v402
        %v611 = vpop.f32.mrf.mxu0
        %v612 = vadd.f32 0.0, %v611
        %v613 = vpop.f32.mrf.mxu0
        %614 = vmatprep.mubr.f32.mxu0 0.0
        %615 = vmatmul.mubr.f32.gmra.mxu0 %v407
        %v616 = vpop.f32.mrf.mxu0
        %v617 = vadd.f32 0.0, %v616
        %v618 = vpop.f32.mrf.mxu0
        %619 = vdwg.mxu0
        %v626 = vcombine.low %v535, %v537
        %v627 = vcombine.high %v535, %v537
        %v628 = vcombine.high %v612, %v612
        %v629 = vcombine.low %v541, %v543
        %v630 = vrot.slane %v626, 7
        %v631 = vrot.slane %v627, 7
        %v632 = vrot.slane %v629, 7
        %vm636 = vcmask 1040384
        %v637 = vsel %vm636, 0.0, %v630
        %v638 = vsel %vm636, 0.0, %v631
        %v639 = vsel %vm636, 0.0, %v632
        %v640 = vadd.f32 %v637, 0.0
        %v641 = vadd.f32 %v638, 0.0
        %v642 = vadd.f32 %v639, 0.0
        %v643 = vcombine.high %v626, %v626
        %v644 = vcombine.high %v627, %v627
        %v645 = vcombine.high %v629, %v629
        %v649 = vadd.f32 %v640, %v643
        %v650 = vadd.f32 %v641, %v644
        %v651 = vadd.f32 %v642, %v645
        %v652 = vrot.slane %v612, 1
        %v653 = vrot.slane %v628, 1
        %v654 = vrot.slane %v617, 1
        %vm658 = vcmask 1042432
        %v659 = vsel %vm658, %v652, 0.0
        %v660 = vsel %vm658, %v653, 0.0
        %v661 = vsel %vm658, %v654, 0.0
        %v662 = vadd.f32 %v649, %v659
        %v663 = vadd.f32 %v650, %v660
        %v664 = vadd.f32 %v651, %v661
        %v665 = vadd.f32 %v662, 0.0
        %v666 = vadd.f32 %v663, 0.0
        %v667 = vadd.f32 %v664, 0.0
        %s668 = scalar_lea.vmem [#allocation7], 384
        %v669 = vld [vmem:[%s668] sm:$0xff]
        %v670 = vld [vmem:[%s668 + $0x8] sm:$0xff]
        %v671 = vld [vmem:[%s668 + $0x10] sm:$0xff]
        %v672 = vld [vmem:[%s668 + $0x18] sm:$0xff]
        %v673 = vld [vmem:[%s668 + $0x20] sm:$0xff]
        %v674 = vld [vmem:[%s668 + $0x28] sm:$0xff]
        %v675 = vld [vmem:[%s668 + $0x30] sm:$0xff]
        %v676 = vld [vmem:[%s668 + $0x38] sm:$0xff]
        %v677 = vld [vmem:[%s668 + $0x40] sm:$0xff]
        %v678 = vld [vmem:[%s668 + $0x48] sm:$0xff]
        %v679 = vld [vmem:[%s668 + $0x50] sm:$0xff]
        %v680 = vld [vmem:[%s668 + $0x58] sm:$0xff]
        %v681 = vld [vmem:[%s668 + $0x60] sm:$0xff]
        %v682 = vld [vmem:[%s668 + $0x68] sm:$0xff]
        %v683 = vld [vmem:[%s668 + $0x70] sm:$0xff]
        %v684 = vld [vmem:[%s668 + $0x78] sm:$0xff]
        %v685 = vld [vmem:[%s668 + $0x80] sm:$0xff]
        %v686 = vld [vmem:[%s668 + $0x88] sm:$0xff]
        %v687 = vld [vmem:[%s668 + $0x90] sm:$0xff]
        %v688 = vld [vmem:[%s668 + $0x98] sm:$0xff]
        %v689 = vld [vmem:[%s668 + $0xa0] sm:$0xff]
        %v690 = vld [vmem:[%s668 + $0xa8] sm:$0xff]
        %v691 = vld [vmem:[%s668 + $0xb0] sm:$0xff]
        %v692 = vld [vmem:[%s668 + $0xb8] sm:$0xff]
        %v693 = vld [vmem:[%s668 + $0xc0] sm:$0xff]
        %v694 = vld [vmem:[%s668 + $0xc8] sm:$0xff]
        %v695 = vld [vmem:[%s668 + $0xd0] sm:$0xff]
        %v696 = vld [vmem:[%s668 + $0xd8] sm:$0xff]
        %v697 = vld [vmem:[%s668 + $0xe0] sm:$0xff]
        %v698 = vld [vmem:[%s668 + $0xe8] sm:$0xff]
        %v699 = vld [vmem:[%s668 + $0xf0] sm:$0xff]
        %v700 = vld [vmem:[%s668 + $0xf8] sm:$0xff]
        %v701 = vld [vmem:[%s668 + $0x100] sm:$0xff]
        %v702 = vld [vmem:[%s668 + $0x108] sm:$0xff]
        %v703 = vld [vmem:[%s668 + $0x110] sm:$0xff]
        %v704 = vld [vmem:[%s668 + $0x118] sm:$0xff]
        %v705 = vld [vmem:[%s668 + $0x120] sm:$0xff]
        %v706 = vld [vmem:[%s668 + $0x128] sm:$0xff]
        %v707 = vld [vmem:[%s668 + $0x130] sm:$0xff]
        %v708 = vld [vmem:[%s668 + $0x138] sm:$0xff]
        %v709 = vld [vmem:[%s668 + $0x140] sm:$0xff]
        %v710 = vld [vmem:[%s668 + $0x148] sm:$0xff]
        %v711 = vld [vmem:[%s668 + $0x150] sm:$0xff]
        %v712 = vld [vmem:[%s668 + $0x158] sm:$0xff]
        %v713 = vld [vmem:[%s668 + $0x160] sm:$0xff]
        %v714 = vld [vmem:[%s668 + $0x168] sm:$0xff]
        %v715 = vld [vmem:[%s668 + $0x170] sm:$0xff]
        %v716 = vld [vmem:[%s668 + $0x178] sm:$0xff]
        %717 = vmatprep.subr.mxu0 %v715
        %718 = vmatpush1.msra.mxu0 %v714
        %719 = vmatprep.subr.mxu0 %v712
        %720 = vmatpush1.msra.mxu0 %v711
        %721 = vmatprep.subr.mxu0 %v709
        %722 = vmatpush1.msra.mxu0 %v708
        %723 = vmatprep.subr.mxu0 %v706
        %724 = vmatpush1.msra.mxu0 %v705
        %725 = vmatprep.subr.mxu0 %v703
        %726 = vmatpush1.msra.mxu0 %v702
        %727 = vmatprep.subr.mxu0 %v700
        %728 = vmatpush1.msra.mxu0 %v699
        %729 = vmatprep.subr.mxu0 %v697
        %730 = vmatpush1.msra.mxu0 %v696
        %731 = vmatprep.subr.mxu0 %v694
        %732 = vmatpush1.msra.mxu0 %v693
        %733 = vmatprep.subr.mxu0 %v691
        %734 = vmatpush1.msra.mxu0 %v690
        %735 = vmatprep.subr.mxu0 %v688
        %736 = vmatpush1.msra.mxu0 %v687
        %737 = vmatprep.subr.mxu0 %v685
        %738 = vmatpush1.msra.mxu0 %v684
        %739 = vmatprep.subr.mxu0 %v682
        %740 = vmatpush1.msra.mxu0 %v681
        %741 = vmatprep.subr.mxu0 %v679
        %742 = vmatpush1.msra.mxu0 %v678
        %743 = vmatprep.subr.mxu0 %v676
        %744 = vmatpush1.msra.mxu0 %v675
        %745 = vmatprep.subr.mxu0 %v673
        %746 = vmatpush1.msra.mxu0 %v672
        %747 = vmatprep.subr.mxu0 %v670
        %748 = vmatpush1.msra.mxu0 %v669
        %749 = vmatprep.subr.mxu0 0.0
        %750 = vmatpush2.msra.mxu0 0.0
        %751 = vmatprep.subr.mxu0 0.0
        %752 = vmatpush2.msra.mxu0 0.0
        %753 = vmatprep.subr.mxu0 0.0
        %754 = vmatpush2.msra.mxu0 0.0
        %755 = vmatprep.subr.mxu0 0.0
        %756 = vmatpush2.msra.mxu0 0.0
        %757 = vmatprep.subr.mxu0 0.0
        %758 = vmatpush2.msra.mxu0 0.0
        %759 = vmatprep.subr.mxu0 0.0
        %760 = vmatpush2.msra.mxu0 0.0
        %761 = vmatprep.subr.mxu0 0.0
        %762 = vmatpush2.msra.mxu0 0.0
        %763 = vmatprep.subr.mxu0 0.0
        %764 = vmatpush2.msra.mxu0 0.0
        %765 = vmatprep.subr.mxu0 0.0
        %766 = vmatpush2.msra.mxu0 0.0
        %767 = vmatprep.subr.mxu0 0.0
        %768 = vmatpush2.msra.mxu0 0.0
        %769 = vmatprep.subr.mxu0 0.0
        %770 = vmatpush2.msra.mxu0 0.0
        %771 = vmatprep.subr.mxu0 0.0
        %772 = vmatpush2.msra.mxu0 0.0
        %773 = vmatprep.subr.mxu0 0.0
        %774 = vmatpush2.msra.mxu0 0.0
        %775 = vmatprep.subr.mxu0 0.0
        %776 = vmatpush2.msra.mxu0 0.0
        %777 = vmatprep.subr.mxu0 0.0
        %778 = vmatpush2.msra.mxu0 0.0
        %779 = vmatprep.subr.mxu0 0.0
        %780 = vmatpush2.msra.mxu0 0.0
        %781 = vmatprep.mubr.f32.mxu0 0.0
        %782 = vmatmul.mubr.f32.gmra.mxu0 %v402
        %v783 = vpop.f32.mrf.mxu0
        %v784 = vadd.f32 0.0, %v783
        %v785 = vpop.f32.mrf.mxu0
        %v786 = vadd.f32 0.0, %v785
        %787 = vmatprep.mubr.f32.mxu0 0.0
        %788 = vmatmul.mubr.f32.gmra.mxu0 %v407
        %v789 = vpop.f32.mrf.mxu0
        %v790 = vadd.f32 0.0, %v789
        %v791 = vpop.f32.mrf.mxu0
        %v792 = vadd.f32 0.0, %v791
        %793 = vdwg.mxu0
        %794 = vmatprep.subr.mxu0 0.0
        %795 = vmatpush1.msra.mxu0 %v716
        %796 = vmatprep.subr.mxu0 0.0
        %797 = vmatpush1.msra.mxu0 %v713
        %798 = vmatprep.subr.mxu0 0.0
        %799 = vmatpush1.msra.mxu0 %v710
        %800 = vmatprep.subr.mxu0 0.0
        %801 = vmatpush1.msra.mxu0 %v707
        %802 = vmatprep.subr.mxu0 0.0
        %803 = vmatpush1.msra.mxu0 %v704
        %804 = vmatprep.subr.mxu0 0.0
        %805 = vmatpush1.msra.mxu0 %v701
        %806 = vmatprep.subr.mxu0 0.0
        %807 = vmatpush1.msra.mxu0 %v698
        %808 = vmatprep.subr.mxu0 0.0
        %809 = vmatpush1.msra.mxu0 %v695
        %810 = vmatprep.subr.mxu0 0.0
        %811 = vmatpush1.msra.mxu0 %v692
        %812 = vmatprep.subr.mxu0 0.0
        %813 = vmatpush1.msra.mxu0 %v689
        %814 = vmatprep.subr.mxu0 0.0
        %815 = vmatpush1.msra.mxu0 %v686
        %816 = vmatprep.subr.mxu0 0.0
        %817 = vmatpush1.msra.mxu0 %v683
        %818 = vmatprep.subr.mxu0 0.0
        %819 = vmatpush1.msra.mxu0 %v680
        %820 = vmatprep.subr.mxu0 0.0
        %821 = vmatpush1.msra.mxu0 %v677
        %822 = vmatprep.subr.mxu0 0.0
        %823 = vmatpush1.msra.mxu0 %v674
        %824 = vmatprep.subr.mxu0 0.0
        %825 = vmatpush1.msra.mxu0 %v671
        %826 = vmatprep.subr.mxu0 0.0
        %827 = vmatpush2.msra.mxu0 0.0
        %828 = vmatprep.subr.mxu0 0.0
        %829 = vmatpush2.msra.mxu0 0.0
        %830 = vmatprep.subr.mxu0 0.0
        %831 = vmatpush2.msra.mxu0 0.0
        %832 = vmatprep.subr.mxu0 0.0
        %833 = vmatpush2.msra.mxu0 0.0
        %834 = vmatprep.subr.mxu0 0.0
        %835 = vmatpush2.msra.mxu0 0.0
        %836 = vmatprep.subr.mxu0 0.0
        %837 = vmatpush2.msra.mxu0 0.0
        %838 = vmatprep.subr.mxu0 0.0
        %839 = vmatpush2.msra.mxu0 0.0
        %840 = vmatprep.subr.mxu0 0.0
        %841 = vmatpush2.msra.mxu0 0.0
        %842 = vmatprep.subr.mxu0 0.0
        %843 = vmatpush2.msra.mxu0 0.0
        %844 = vmatprep.subr.mxu0 0.0
        %845 = vmatpush2.msra.mxu0 0.0
        %846 = vmatprep.subr.mxu0 0.0
        %847 = vmatpush2.msra.mxu0 0.0
        %848 = vmatprep.subr.mxu0 0.0
        %849 = vmatpush2.msra.mxu0 0.0
        %850 = vmatprep.subr.mxu0 0.0
        %851 = vmatpush2.msra.mxu0 0.0
        %852 = vmatprep.subr.mxu0 0.0
        %853 = vmatpush2.msra.mxu0 0.0
        %854 = vmatprep.subr.mxu0 0.0
        %855 = vmatpush2.msra.mxu0 0.0
        %856 = vmatprep.subr.mxu0 0.0
        %857 = vmatpush2.msra.mxu0 0.0
        %858 = vmatprep.mubr.f32.mxu0 0.0
        %859 = vmatmul.mubr.f32.gmra.mxu0 %v402
        %v860 = vpop.f32.mrf.mxu0
        %v861 = vadd.f32 0.0, %v860
        %v862 = vpop.f32.mrf.mxu0
        %863 = vmatprep.mubr.f32.mxu0 0.0
        %864 = vmatmul.mubr.f32.gmra.mxu0 %v407
        %v865 = vpop.f32.mrf.mxu0
        %v866 = vadd.f32 0.0, %v865
        %v867 = vpop.f32.mrf.mxu0
        %868 = vdwg.mxu0
        %v875 = vcombine.low %v784, %v786
        %v876 = vcombine.high %v784, %v786
        %v877 = vcombine.high %v861, %v861
        %v878 = vcombine.low %v790, %v792
        %v879 = vcombine.high %v790, %v792
        %v880 = vcombine.high %v866, %v866
        %v881 = vrot.slane %v875, 7
        %v882 = vrot.slane %v876, 7
        %v883 = vrot.slane %v878, 7
        %v884 = vrot.slane %v879, 7
        %v889 = vsel %vm636, 0.0, %v881
        %v890 = vsel %vm636, 0.0, %v882
        %v891 = vsel %vm636, 0.0, %v883
        %v892 = vsel %vm636, 0.0, %v884
        %v893 = vadd.f32 %v889, 0.0
        %v894 = vadd.f32 %v890, 0.0
        %v895 = vadd.f32 %v891, 0.0
        %v896 = vadd.f32 %v892, 0.0
        %v897 = vcombine.high %v875, %v875
        %v898 = vcombine.high %v876, %v876
        %v899 = vcombine.high %v878, %v878
        %v900 = vcombine.high %v879, %v879
        %v905 = vadd.f32 %v893, %v897
        %v906 = vadd.f32 %v894, %v898
        %v907 = vadd.f32 %v895, %v899
        %v908 = vadd.f32 %v896, %v900
        %v909 = vrot.slane %v861, 1
        %v910 = vrot.slane %v877, 1
        %v911 = vrot.slane %v866, 1
        %v912 = vrot.slane %v880, 1
        %v917 = vsel %vm658, %v909, 0.0
        %v918 = vsel %vm658, %v910, 0.0
        %v919 = vsel %vm658, %v911, 0.0
        %v920 = vsel %vm658, %v912, 0.0
        %v921 = vadd.f32 %v905, %v917
        %v922 = vadd.f32 %v906, %v918
        %v923 = vadd.f32 %v907, %v919
        %v924 = vadd.f32 %v908, %v920
        %v925 = vadd.f32 %v921, 0.0
        %v926 = vadd.f32 %v665, %v922
        %v927 = vadd.f32 %v666, %v923
        %v928 = vadd.f32 %v667, %v924
        %s929 = scalar_lea.vmem [#allocation7], 768
        %v930 = vld [vmem:[%s929] sm:$0xff]
        %v931 = vld [vmem:[%s929 + $0x8] sm:$0xff]
        %v932 = vld [vmem:[%s929 + $0x10] sm:$0xff]
        %v933 = vld [vmem:[%s929 + $0x18] sm:$0xff]
        %v934 = vld [vmem:[%s929 + $0x20] sm:$0xff]
        %v935 = vld [vmem:[%s929 + $0x28] sm:$0xff]
        %v936 = vld [vmem:[%s929 + $0x30] sm:$0xff]
        %v937 = vld [vmem:[%s929 + $0x38] sm:$0xff]
        %v938 = vld [vmem:[%s929 + $0x40] sm:$0xff]
        %v939 = vld [vmem:[%s929 + $0x48] sm:$0xff]
        %v940 = vld [vmem:[%s929 + $0x50] sm:$0xff]
        %v941 = vld [vmem:[%s929 + $0x58] sm:$0xff]
        %v942 = vld [vmem:[%s929 + $0x60] sm:$0xff]
        %v943 = vld [vmem:[%s929 + $0x68] sm:$0xff]
        %v944 = vld [vmem:[%s929 + $0x70] sm:$0xff]
        %v945 = vld [vmem:[%s929 + $0x78] sm:$0xff]
        %v946 = vld [vmem:[%s929 + $0x80] sm:$0xff]
        %v947 = vld [vmem:[%s929 + $0x88] sm:$0xff]
        %v948 = vld [vmem:[%s929 + $0x90] sm:$0xff]
        %v949 = vld [vmem:[%s929 + $0x98] sm:$0xff]
        %v950 = vld [vmem:[%s929 + $0xa0] sm:$0xff]
        %v951 = vld [vmem:[%s929 + $0xa8] sm:$0xff]
        %v952 = vld [vmem:[%s929 + $0xb0] sm:$0xff]
        %v953 = vld [vmem:[%s929 + $0xb8] sm:$0xff]
        %v954 = vld [vmem:[%s929 + $0xc0] sm:$0xff]
        %v955 = vld [vmem:[%s929 + $0xc8] sm:$0xff]
        %v956 = vld [vmem:[%s929 + $0xd0] sm:$0xff]
        %v957 = vld [vmem:[%s929 + $0xd8] sm:$0xff]
        %v958 = vld [vmem:[%s929 + $0xe0] sm:$0xff]
        %v959 = vld [vmem:[%s929 + $0xe8] sm:$0xff]
        %v960 = vld [vmem:[%s929 + $0xf0] sm:$0xff]
        %v961 = vld [vmem:[%s929 + $0xf8] sm:$0xff]
        %v962 = vld [vmem:[%s929 + $0x100] sm:$0xff]
        %v963 = vld [vmem:[%s929 + $0x108] sm:$0xff]
        %v964 = vld [vmem:[%s929 + $0x110] sm:$0xff]
        %v965 = vld [vmem:[%s929 + $0x118] sm:$0xff]
        %v966 = vld [vmem:[%s929 + $0x120] sm:$0xff]
        %v967 = vld [vmem:[%s929 + $0x128] sm:$0xff]
        %v968 = vld [vmem:[%s929 + $0x130] sm:$0xff]
        %v969 = vld [vmem:[%s929 + $0x138] sm:$0xff]
        %v970 = vld [vmem:[%s929 + $0x140] sm:$0xff]
        %v971 = vld [vmem:[%s929 + $0x148] sm:$0xff]
        %v972 = vld [vmem:[%s929 + $0x150] sm:$0xff]
        %v973 = vld [vmem:[%s929 + $0x158] sm:$0xff]
        %v974 = vld [vmem:[%s929 + $0x160] sm:$0xff]
        %v975 = vld [vmem:[%s929 + $0x168] sm:$0xff]
        %v976 = vld [vmem:[%s929 + $0x170] sm:$0xff]
        %v977 = vld [vmem:[%s929 + $0x178] sm:$0xff]
        %978 = vmatprep.subr.mxu0 %v976
        %979 = vmatpush1.msra.mxu0 %v975
        %980 = vmatprep.subr.mxu0 %v973
        %981 = vmatpush1.msra.mxu0 %v972
        %982 = vmatprep.subr.mxu0 %v970
        %983 = vmatpush1.msra.mxu0 %v969
        %984 = vmatprep.subr.mxu0 %v967
        %985 = vmatpush1.msra.mxu0 %v966
        %986 = vmatprep.subr.mxu0 %v964
        %987 = vmatpush1.msra.mxu0 %v963
        %988 = vmatprep.subr.mxu0 %v961
        %989 = vmatpush1.msra.mxu0 %v960
        %990 = vmatprep.subr.mxu0 %v958
        %991 = vmatpush1.msra.mxu0 %v957
        %992 = vmatprep.subr.mxu0 %v955
        %993 = vmatpush1.msra.mxu0 %v954
        %994 = vmatprep.subr.mxu0 %v952
        %995 = vmatpush1.msra.mxu0 %v951
        %996 = vmatprep.subr.mxu0 %v949
        %997 = vmatpush1.msra.mxu0 %v948
        %998 = vmatprep.subr.mxu0 %v946
        %999 = vmatpush1.msra.mxu0 %v945
        %1000 = vmatprep.subr.mxu0 %v943
        %1001 = vmatpush1.msra.mxu0 %v942
        %1002 = vmatprep.subr.mxu0 %v940
        %1003 = vmatpush1.msra.mxu0 %v939
        %1004 = vmatprep.subr.mxu0 %v937
        %1005 = vmatpush1.msra.mxu0 %v936
        %1006 = vmatprep.subr.mxu0 %v934
        %1007 = vmatpush1.msra.mxu0 %v933
        %1008 = vmatprep.subr.mxu0 %v931
        %1009 = vmatpush1.msra.mxu0 %v930
        %1010 = vmatprep.subr.mxu0 0.0
        %1011 = vmatpush2.msra.mxu0 0.0
        %1012 = vmatprep.subr.mxu0 0.0
        %1013 = vmatpush2.msra.mxu0 0.0
        %1014 = vmatprep.subr.mxu0 0.0
        %1015 = vmatpush2.msra.mxu0 0.0
        %1016 = vmatprep.subr.mxu0 0.0
        %1017 = vmatpush2.msra.mxu0 0.0
        %1018 = vmatprep.subr.mxu0 0.0
        %1019 = vmatpush2.msra.mxu0 0.0
        %1020 = vmatprep.subr.mxu0 0.0
        %1021 = vmatpush2.msra.mxu0 0.0
        %1022 = vmatprep.subr.mxu0 0.0
        %1023 = vmatpush2.msra.mxu0 0.0
        %1024 = vmatprep.subr.mxu0 0.0
        %1025 = vmatpush2.msra.mxu0 0.0
        %1026 = vmatprep.subr.mxu0 0.0
        %1027 = vmatpush2.msra.mxu0 0.0
        %1028 = vmatprep.subr.mxu0 0.0
        %1029 = vmatpush2.msra.mxu0 0.0
        %1030 = vmatprep.subr.mxu0 0.0
        %1031 = vmatpush2.msra.mxu0 0.0
        %1032 = vmatprep.subr.mxu0 0.0
        %1033 = vmatpush2.msra.mxu0 0.0
        %1034 = vmatprep.subr.mxu0 0.0
        %1035 = vmatpush2.msra.mxu0 0.0
        %1036 = vmatprep.subr.mxu0 0.0
        %1037 = vmatpush2.msra.mxu0 0.0
        %1038 = vmatprep.subr.mxu0 0.0
        %1039 = vmatpush2.msra.mxu0 0.0
        %1040 = vmatprep.subr.mxu0 0.0
        %1041 = vmatpush2.msra.mxu0 0.0
        %1042 = vmatprep.mubr.f32.mxu0 0.0
        %1043 = vmatmul.mubr.f32.gmra.mxu0 %v402
        %v1044 = vpop.f32.mrf.mxu0
        %v1045 = vadd.f32 0.0, %v1044
        %v1046 = vpop.f32.mrf.mxu0
        %v1047 = vadd.f32 0.0, %v1046
        %1048 = vmatprep.mubr.f32.mxu0 0.0
        %1049 = vmatmul.mubr.f32.gmra.mxu0 %v407
        %v1050 = vpop.f32.mrf.mxu0
        %v1051 = vadd.f32 0.0, %v1050
        %v1052 = vpop.f32.mrf.mxu0
        %v1053 = vadd.f32 0.0, %v1052
        %1054 = vdwg.mxu0
        %1055 = vmatprep.subr.mxu0 0.0
        %1056 = vmatpush1.msra.mxu0 %v977
        %1057 = vmatprep.subr.mxu0 0.0
        %1058 = vmatpush1.msra.mxu0 %v974
        %1059 = vmatprep.subr.mxu0 0.0
        %1060 = vmatpush1.msra.mxu0 %v971
        %1061 = vmatprep.subr.mxu0 0.0
        %1062 = vmatpush1.msra.mxu0 %v968
        %1063 = vmatprep.subr.mxu0 0.0
        %1064 = vmatpush1.msra.mxu0 %v965
        %1065 = vmatprep.subr.mxu0 0.0
        %1066 = vmatpush1.msra.mxu0 %v962
        %1067 = vmatprep.subr.mxu0 0.0
        %1068 = vmatpush1.msra.mxu0 %v959
        %1069 = vmatprep.subr.mxu0 0.0
        %1070 = vmatpush1.msra.mxu0 %v956
        %1071 = vmatprep.subr.mxu0 0.0
        %1072 = vmatpush1.msra.mxu0 %v953
        %1073 = vmatprep.subr.mxu0 0.0
        %1074 = vmatpush1.msra.mxu0 %v950
        %1075 = vmatprep.subr.mxu0 0.0
        %1076 = vmatpush1.msra.mxu0 %v947
        %1077 = vmatprep.subr.mxu0 0.0
        %1078 = vmatpush1.msra.mxu0 %v944
        %1079 = vmatprep.subr.mxu0 0.0
        %1080 = vmatpush1.msra.mxu0 %v941
        %1081 = vmatprep.subr.mxu0 0.0
        %1082 = vmatpush1.msra.mxu0 %v938
        %1083 = vmatprep.subr.mxu0 0.0
        %1084 = vmatpush1.msra.mxu0 %v935
        %1085 = vmatprep.subr.mxu0 0.0
        %1086 = vmatpush1.msra.mxu0 %v932
        %1087 = vmatprep.subr.mxu0 0.0
        %1088 = vmatpush2.msra.mxu0 0.0
        %1089 = vmatprep.subr.mxu0 0.0
        %1090 = vmatpush2.msra.mxu0 0.0
        %1091 = vmatprep.subr.mxu0 0.0
        %1092 = vmatpush2.msra.mxu0 0.0
        %1093 = vmatprep.subr.mxu0 0.0
        %1094 = vmatpush2.msra.mxu0 0.0
        %1095 = vmatprep.subr.mxu0 0.0
        %1096 = vmatpush2.msra.mxu0 0.0
        %1097 = vmatprep.subr.mxu0 0.0
        %1098 = vmatpush2.msra.mxu0 0.0
        %1099 = vmatprep.subr.mxu0 0.0
        %1100 = vmatpush2.msra.mxu0 0.0
        %1101 = vmatprep.subr.mxu0 0.0
        %1102 = vmatpush2.msra.mxu0 0.0
        %1103 = vmatprep.subr.mxu0 0.0
        %1104 = vmatpush2.msra.mxu0 0.0
        %1105 = vmatprep.subr.mxu0 0.0
        %1106 = vmatpush2.msra.mxu0 0.0
        %1107 = vmatprep.subr.mxu0 0.0
        %1108 = vmatpush2.msra.mxu0 0.0
        %1109 = vmatprep.subr.mxu0 0.0
        %1110 = vmatpush2.msra.mxu0 0.0
        %1111 = vmatprep.subr.mxu0 0.0
        %1112 = vmatpush2.msra.mxu0 0.0
        %1113 = vmatprep.subr.mxu0 0.0
        %1114 = vmatpush2.msra.mxu0 0.0
        %1115 = vmatprep.subr.mxu0 0.0
        %1116 = vmatpush2.msra.mxu0 0.0
        %1117 = vmatprep.subr.mxu0 0.0
        %1118 = vmatpush2.msra.mxu0 0.0
        %1119 = vmatprep.mubr.f32.mxu0 0.0
        %1120 = vmatmul.mubr.f32.gmra.mxu0 %v402
        %v1121 = vpop.f32.mrf.mxu0
        %v1122 = vadd.f32 0.0, %v1121
        %v1123 = vpop.f32.mrf.mxu0
        %1124 = vmatprep.mubr.f32.mxu0 0.0
        %1125 = vmatmul.mubr.f32.gmra.mxu0 %v407
        %v1126 = vpop.f32.mrf.mxu0
        %v1127 = vadd.f32 0.0, %v1126
        %v1128 = vpop.f32.mrf.mxu0
        %1129 = vdwg.mxu0
        %v1136 = vcombine.high %v1045, %v1047
        %v1137 = vcombine.high %v1122, %v1122
        %v1138 = vcombine.low %v1051, %v1053
        %v1139 = vcombine.high %v1051, %v1053
        %v1140 = vcombine.high %v1127, %v1127
        %v1141 = vrot.slane %v1136, 7
        %v1142 = vrot.slane %v1138, 7
        %v1143 = vrot.slane %v1139, 7
        %v1147 = vsel %vm636, 0.0, %v1141
        %v1148 = vsel %vm636, 0.0, %v1142
        %v1149 = vsel %vm636, 0.0, %v1143
        %v1150 = vadd.f32 %v1147, 0.0
        %v1151 = vadd.f32 %v1148, 0.0
        %v1152 = vadd.f32 %v1149, 0.0
        %v1153 = vcombine.high %v1136, %v1136
        %v1154 = vcombine.high %v1138, %v1138
        %v1155 = vcombine.high %v1139, %v1139
        %v1159 = vadd.f32 %v1150, %v1153
        %v1160 = vadd.f32 %v1151, %v1154
        %v1161 = vadd.f32 %v1152, %v1155
        %v1162 = vrot.slane %v1137, 1
        %v1163 = vrot.slane %v1127, 1
        %v1164 = vrot.slane %v1140, 1
        %v1168 = vsel %vm658, %v1162, 0.0
        %v1169 = vsel %vm658, %v1163, 0.0
        %v1170 = vsel %vm658, %v1164, 0.0
        %v1171 = vadd.f32 %v1159, %v1168
        %v1172 = vadd.f32 %v1160, %v1169
        %v1173 = vadd.f32 %v1161, %v1170
        %v1174 = vadd.f32 %v925, %v1171
        %v1175 = vadd.f32 %v926, %v1172
        %v1176 = vadd.f32 %v927, %v1173
        %v1177 = vadd.f32 %v928, 0.0
        %v1178 = vld [vmem:[%s4] sm:$0x1]
        %v1180 = vlaneseq
        %v1181 = vshrl.u32 %v1180, 7
        %v1182 = vsub.s32 0, %v1181
        %v1183 = vrot.slane %v1178, %v1182
        %v1185 = vadd.f32 %v1174, %v1183
        %v1186 = vadd.f32 %v1175, %v1183
        %v1187 = vadd.f32 %v1176, %v1183
        %v1188 = vadd.f32 %v1177, %v1183
        %1189 = vst [vmem:[%s309] sm:$0xf] %v1185
        %1190 = vst [vmem:[%s309 + $0x4] sm:$0xf] %v1186
        %1191 = vst [vmem:[%s309 + $0x8] sm:$0xf] %v1187
        %1192 = vst [vmem:[%s309 + $0xc] sm:$0xf] %v1188
        %s1193 = sand.u32 %s146, 1
        %s1194 = scalar_lea.sflag [#allocation4], %s1193
        %s1195 = sand.u32 %s146, 1
        %s1196 = smul.addr %s1195, 16
        %s1197 = scalar_lea.vmem [#allocation8], %s1196
        %s1198 = sand.u32 %s172, 1
        %s1199 = scalar_lea.sflag [#allocation10], %s1198
        %s1200 = sand.u32 %s172, 1
        %s1201 = smul.addr %s1200, 16
        %s1202 = scalar_lea.vmem [#allocation9], %s1201
        // Predicated region
        $region53: #{tpu_custom_call.1} parent=39 // pred_check
          %p1203 = pneg %p156
        $region54: #{tpu_custom_call.1} parent=39 // pred_check_branch
          %1205 = sbr.rel (%p1203) target = $region56
        $region55: #{tpu_custom_call.1} parent=39 // pred_region
          %s1207 = ssub.s32 256, 256
          %1208 = vsyncadd %s1194, %s1207
          %s1209 = smul.addr %s28, 4
          %s1210 = smul.addr %s1209, 64
          %s1211 = scalar_lea.hbm %s5, %s1210
          %s1212 = sshll.u32 %s1197, 4
          %s1213 = int_to_ptr.vmem [resolvable:$true] %s1212
          %1218 = dma.vmem_to_hbm [thread:$0]  %s1213, 256, %s1211, %s1194, 64, 64, 4
        $region56: #{tpu_custom_call.1} parent=39 // pred_fallthru
          _
        // Predicated region
        $region57: #{tpu_custom_call.1} parent=39 // pred_check
          %p1219 = pneg %p182
        $region58: #{tpu_custom_call.1} parent=39 // pred_check_branch
          %1221 = sbr.rel (%p1219) target = $region60
        $region59: #{tpu_custom_call.1} parent=39 // pred_region
          %s1223 = ssub.s32 256, 256
          %1224 = vsyncadd %s1199, %s1223
          %s1225 = smul.addr %s28, 4
          %s1226 = smul.addr %s1225, 64
          %s1227 = scalar_lea.hbm %s6, %s1226
          %s1228 = sshll.u32 %s1202, 4
          %s1229 = int_to_ptr.vmem [resolvable:$true] %s1228
          %1234 = dma.vmem_to_hbm [thread:$0]  %s1229, 256, %s1227, %s1199, 64, 64, 4
        $region60: #{tpu_custom_call.1} parent=39 // pred_fallthru
          _
      $region40: #{tpu_custom_call.1} parent=5 // pred_fallthru
        _
      %p1235 = scmp.le.s32.totalorder 2, %s23
      // Predicated region
      $region61: #{tpu_custom_call.1} parent=5 // pred_check
        %p1236 = pneg %p1235
      $region62: #{tpu_custom_call.1} parent=5 // pred_check_branch
        %1238 = sbr.rel (%p1236) target = $region64
      $region63: #{tpu_custom_call.1} parent=5 // pred_region
        %s1239 = ssub.s32 %s23, 2
        // Predicated region
        $region65: #{tpu_custom_call.1} parent=63 // pred_check
          %p1240 = pneg %p162
        $region66: #{tpu_custom_call.1} parent=63 // pred_check_branch
          %1242 = sbr.rel (%p1240) target = $region68
        $region67: #{tpu_custom_call.1} parent=63 // pred_region
          %s1243 = sand.u32 %s147, 1
          %s1244 = scalar_lea.sflag [#allocation4], %s1243
          %s1245 = sand.u32 %s147, 1
          %s1246 = smul.addr %s1245, 16
          %s1247 = scalar_lea.vmem [#allocation8], %s1246
          %1248 = dma.done %s1244, 256
        $region68: #{tpu_custom_call.1} parent=63 // pred_fallthru
          _
        // Predicated region
        $region69: #{tpu_custom_call.1} parent=63 // pred_check
          %p1249 = pneg %p188
        $region70: #{tpu_custom_call.1} parent=63 // pred_check_branch
          %1251 = sbr.rel (%p1249) target = $region72
        $region71: #{tpu_custom_call.1} parent=63 // pred_region
          %s1252 = sand.u32 %s173, 1
          %s1253 = scalar_lea.sflag [#allocation10], %s1252
          %s1254 = sand.u32 %s173, 1
          %s1255 = smul.addr %s1254, 16
          %s1256 = scalar_lea.vmem [#allocation9], %s1255
          %1257 = dma.done %s1253, 256
        $region72: #{tpu_custom_call.1} parent=63 // pred_fallthru
          _
      $region64: #{tpu_custom_call.1} parent=5 // pred_fallthru
        _
    $region6: #{tpu_custom_call.1} parent=1 // loop_footer
      %s27 = sadd.s32 1, %s23
    $region7: #{tpu_custom_call.1} parent=1 // loop_footer_branch
      %22 = sbr.rel target = $region3
    $region8: #{tpu_custom_call.1} parent=1 // loop_exit
      _
    %1258 = vsyncpa [#allocation3], 1
    %s1259 = scalar_lea.sflag [#allocation3], 1
    %1260 = vsyncpa %s1259, 1
    %1261 = vsyncpa [#allocation6], 1
    %1262 = vsyncpa [#allocation4], 1
    %s1263 = scalar_lea.sflag [#allocation4], 1
    %1264 = vsyncpa %s1263, 1
    %1265 = vsyncpa [#allocation10], 1
    %s1266 = scalar_lea.sflag [#allocation10], 1
    %1267 = vsyncpa %s1266, 1

</llo_original>
